<compile_context>
chip_gen: v7x
topology: tpu7x:2x2x1
jax: 0.10.0
libtpu: 0.0.40
codegen_flags: <defaults>
</compile_context>

<pallas_src>
import numpy as np
import jax
import jax.numpy as jnp
from jax.experimental import pallas as pl
from jax.experimental.pallas import tpu as pltpu


def _cdiv(a, b):
    return (a + b - 1) // b


# --------------------------------------------------------------------------
# Fused kernel: num_layers-deep LSTM (gate order [i, f, o | g], g pre-scaled by 2)
# + per-row contiguous pre-position gather + tanh -> folded (mlp o event|time) head.
# --------------------------------------------------------------------------
def _make_erpp_kernel(num_layers, batch_tile, seq_len, hidden, pre_steps):
    BT, T, H, P = batch_tile, seq_len, hidden, pre_steps

    def kernel(pre_start_ref, x_ref, *args):
        n_l = 3 * num_layers
        layer_refs = args[:n_l]
        w_fold_ref, b_fold_ref = args[n_l], args[n_l + 1]
        out_ref = args[n_l + 2]
        seq_scr = args[n_l + 3]                     # (T, BT, H): final layer's hidden seq

        def run_layer(inp_tm, w_ih_ref, w_hh_ref, b_ref, is_last):
            # Hoisted input projection: one (T*BT, d_in) @ (d_in, 4H) MXU matmul + bias
            # for the whole sequence.  Only h @ W_hh stays on the serial path.
            gates_x = (jnp.dot(inp_tm, w_ih_ref[...],
                               preferred_element_type=jnp.float32)
                       + b_ref[...])                # (T*BT, 4H) time-major
            w_hh = w_hh_ref[...]                    # hoisted out of the loop
            h = jnp.zeros((BT, H), jnp.float32)
            c = jnp.zeros((BT, H), jnp.float32)
            hs = []
            # Static full unroll of the (small) recurrence for LLO scheduler visibility.
            for t in range(T):
                g = gates_x[t * BT:(t + 1) * BT, :] + jnp.dot(
                    h, w_hh, preferred_element_type=jnp.float32)       # (BT, 4H)
                # Gates packed [i, f, o | g] with g columns pre-scaled by 2 at init, so
                # ONE sigmoid over all 4H lanes replaces sigmoid(3H)+tanh(H):
                #   tanh(x) = 2*sigmoid(2x) - 1  (the fixup is a VPU fma, not an EUP op).
                s = jax.nn.sigmoid(g)
                i_g = s[:, 0 * H:1 * H]
                f_g = s[:, 1 * H:2 * H]
                o_g = s[:, 2 * H:3 * H]
                g_g = 2.0 * s[:, 3 * H:4 * H] - 1.0
                c = f_g * c + i_g * g_g
                h = o_g * jnp.tanh(c)
                if is_last:
                    seq_scr[t] = h                  # only the final layer hits the scratch
                else:
                    hs.append(h)
            if is_last:
                return None
            return jnp.concatenate(hs, axis=0)      # (T*BT, H) register-value handoff

        inp = x_ref[0]                              # (T*BT, D) time-major slab
        for l in range(num_layers):
            w_ih_ref, w_hh_ref, b_ref = layer_refs[3 * l:3 * l + 3]
            is_last = (l + 1 == num_layers)
            nxt = run_layer(inp, w_ih_ref, w_hh_ref, b_ref, is_last)
            if not is_last:
                inp = nxt
            # TODO(synk): nn.LSTM inter-layer dropout(0.1) is train-only; eval forward is identity.

        # Fused head: per row, ONE contiguous dynamic time-slice (pre positions are
        # consecutive: vl - pre_len + k), batched across the tile into a single
        # (BT*P, H) tanh + matmul against the pre-folded (mlp o event|time) projection,
        # then one lane-dense (BT, P, 128) store.
        bi = pl.program_id(0)
        pre_rows = []
        for r in range(BT):
            start = pre_start_ref[bi * BT + r]                   # scalar from SMEM
            pre3 = seq_scr[pl.ds(start, P), :, :]                # (P, BT, H), dyn leading dim
            pre_rows.append(pre3[:, r, :])                       # (P, H) static row select
        pre = jnp.concatenate(pre_rows, axis=0)                  # (BT*P, H)
        head = (jnp.dot(jnp.tanh(pre), w_fold_ref[...],
                        preferred_element_type=jnp.float32)
                + b_fold_ref[...])                               # (BT*P, O_pad)
        out_ref[...] = head.reshape(BT, P, head.shape[-1])

    return kernel


def erpp_fused_forward_call(pre_start, packed, lstm_layers, w_fold, b_fold, pre_steps):
    """pre_start: (B,) int32; packed: (B, T, D) f32 -> (B, P, O_pad) f32."""
    B, T, D = packed.shape
    P = pre_steps
    H = lstm_layers[0]["w_hh_t"].shape[0]
    O_pad = w_fold.shape[1]
    num_layers = len(lstm_layers)

    # Batch tiling: rows share every matmul's M dimension, so pack up to 8 rows (one
    # sublane tile) per grid step; keep >= 2 grid steps when possible so v7x's second
    # TensorCore gets half the batch.
    num_splits = 2 if B >= 2 else 1
    BT = max(1, min(8, _cdiv(B, num_splits)))
    G = _cdiv(B, BT)
    B_pad = G * BT

    if B_pad != B:
        packed = jnp.concatenate(
            [packed, jnp.zeros((B_pad - B, T, D), packed.dtype)], axis=0)
        pre_start = np.concatenate(
            [np.asarray(pre_start, np.int32), np.zeros(B_pad - B, np.int32)])
    pre_start = jnp.asarray(pre_start, jnp.int32)

    # Time-major layout per grid block: (G, T*BT, D) so the hoisted input projection is
    # one 2-D matmul and the per-timestep gate slab is a contiguous static slice.
    x_blk = packed.reshape(G, BT, T, D).transpose(0, 2, 1, 3).reshape(G, T * BT, D)

    layer_inputs, layer_specs = [], []
    for layer in lstm_layers:
        d_in = layer["w_ih_t"].shape[0]
        layer_inputs += [layer["w_ih_t"], layer["w_hh_t"], layer["b"]]
        layer_specs += [
            pl.BlockSpec((d_in, 4 * H), lambda b, pre: (0, 0)),
            pl.BlockSpec((H, 4 * H), lambda b, pre: (0, 0)),
            pl.BlockSpec((1, 4 * H), lambda b, pre: (0, 0)),
        ]

    grid_spec = pltpu.PrefetchScalarGridSpec(
        num_scalar_prefetch=1,
        grid=(G,),
        in_specs=[pl.BlockSpec((1, T * BT, D), lambda b, pre: (b, 0, 0))]
                 + layer_specs
                 + [pl.BlockSpec((H, O_pad), lambda b, pre: (0, 0)),
                    pl.BlockSpec((1, O_pad), lambda b, pre: (0, 0))],
        out_specs=pl.BlockSpec((BT, P, O_pad), lambda b, pre: (b, 0, 0)),
        scratch_shapes=[pltpu.VMEM((T, BT, H), jnp.float32)],
    )

    out = pl.pallas_call(
        _make_erpp_kernel(num_layers, BT, T, H, P),
        out_shape=jax.ShapeDtypeStruct((B_pad, P, O_pad), jnp.float32),
        grid_spec=grid_spec,
        compiler_params=pltpu.CompilerParams(
            dimension_semantics=("parallel",)),   # independent batch tiles -> v7x megacore
    )(pre_start, x_blk, *layer_inputs, w_fold, b_fold)
    return out[:B]


# --------------------------------------------------------------------------
# Deterministic parameter construction (synthetic, mirrors module __init__ shapes).
# Weights are generated in PyTorch layout, then packed for the kernel:
#   * gate columns permuted [i, f, g, o] -> [i, f, o, g], g columns pre-scaled by 2
#   * mlp Linear + event/time heads folded into one (H, 128)-padded projection
# --------------------------------------------------------------------------
def init_params(key, vocab, input_size, lstm_hidden, hidden, output_size, num_layers):
    ks = list(jax.random.split(key, 4 * num_layers + 8))
    ki = 0

    def nxt(shape, scale=0.1):
        nonlocal ki
        w = jax.random.normal(ks[ki], shape, jnp.float32) * scale
        ki += 1
        return w

    H = lstm_hidden
    gate_perm = np.concatenate([np.arange(0, 2 * H),       # i, f
                                np.arange(3 * H, 4 * H),   # o
                                np.arange(2 * H, 3 * H)])  # g
    gate_scale = jnp.concatenate([jnp.ones((3 * H,), jnp.float32),
                                  2.0 * jnp.ones((H,), jnp.float32)])   # tanh(x)=2*sig(2x)-1

    p = {}
    p["embed"] = nxt((vocab, input_size))                  # simple embedding table
    D = input_size + 1
    layers = []
    for l in range(num_layers):
        d_in = D if l == 0 else H
        w_ih = nxt((4 * H, d_in))      # PyTorch weight_ih_l{l}: (4H, d_in)
        w_hh = nxt((4 * H, H))         # weight_hh_l{l}: (4H, H)
        b_ih = nxt((4 * H,))
        b_hh = nxt((4 * H,))
        layers.append({
            "w_ih_t": w_ih.T[:, gate_perm] * gate_scale,
            "w_hh_t": w_hh.T[:, gate_perm] * gate_scale,
            "b": ((b_ih + b_hh)[gate_perm] * gate_scale).reshape(1, 4 * H),
        })
    p["lstm"] = layers

    # mlp = Sequential(Tanh(), Linear(H, hidden)); event/time heads follow with NO
    # intervening nonlinearity (per the spec), so the two Linears fold exactly:
    #   out = tanh(pre) @ (W_mlp^T @ W_head^T) + (b_mlp @ W_head^T + b_head)
    w_mlp = nxt((hidden, H))                               # nn.Linear(H, hidden)
    b_mlp = nxt((hidden,))
    w_ev = nxt((output_size, hidden))                      # nn.Linear(hidden, output_size)
    b_ev = nxt((output_size,))
    w_tm = nxt((1, hidden))                                # nn.Linear(hidden, 1)
    b_tm = nxt((1,))
    w_head_t = jnp.concatenate([w_ev.T, w_tm.T], axis=1)   # (hidden, O_tot)
    b_head = jnp.concatenate([b_ev, b_tm])                 # (O_tot,)
    w_fold = w_mlp.T @ w_head_t                            # (H, O_tot)
    b_fold = b_mlp @ w_head_t + b_head                     # (O_tot,)

    O_tot = output_size + 1
    O_pad = _cdiv(O_tot, 128) * 128                        # lane-dense head output
    p["w_fold"] = jnp.zeros((H, O_pad), jnp.float32).at[:, :O_tot].set(w_fold)
    p["b_fold"] = jnp.zeros((1, O_pad), jnp.float32).at[:, :O_tot].set(b_fold)
    p["o_tot"] = O_tot
    return p


# --------------------------------------------------------------------------
# Forward pass (glue gathers in plain JAX/numpy, hot path in the fused kernel)
# --------------------------------------------------------------------------
def erpp_time_predictor_forward(params, input_time, input_events, valid_len, pre_len):
    # embed_layer(input_events, ...): synthetic embedding lookup (glue gather in XLA).
    emb = jnp.take(params["embed"], input_events, axis=0)            # (B, S, E)
    lstm_input = jnp.concatenate([emb, input_time[..., None]], -1)   # (B, S, E+1)
    B, S, D = lstm_input.shape

    vl = np.asarray(valid_len)
    max_len = int(vl.max())        # host-side static; a new batch max => recompile
    T = max_len - 1                # per-row length: (s-pre_len) + (pre_len-1) + (max_len-s)
    P = pre_len - 1

    # Re-pack: [ lstm_input[i, :s-pre_len], lstm_input[i, -pre_len:-1], zeros ]
    j = np.arange(T)[None, :]                                        # (1, T)
    s = vl[:, None]                                                  # (B, 1)
    gather_idx = np.where(j < s - pre_len, j, S - pre_len + (j - (s - pre_len)))
    gather_idx = np.clip(gather_idx, 0, S - 1)
    mask = (j < s - 1).astype(np.float32)                            # zero-pad tail
    packed = jnp.take_along_axis(lstm_input,
                                 jnp.asarray(gather_idx)[:, :, None], axis=1)
    packed = packed * jnp.asarray(mask)[:, :, None]                  # (B, T, D)

    # Pre positions lstm_out[i, s-pre_len : s-1] are consecutive -> only the start index
    # is needed; the kernel takes ONE contiguous dynamic slice per row.
    pre_start = (vl - pre_len).astype(np.int32)                      # (B,)
    assert np.all(pre_start >= 0) and np.all(pre_start + P <= T), \
        "pre-position gather out of range (valid_len must be >= pre_len)"

    out = erpp_fused_forward_call(pre_start, packed, params["lstm"],
                                  params["w_fold"], params["b_fold"], P)  # (B, P, O_pad)
    O_tot = params["o_tot"]
    event_out = out[:, :, :O_tot - 1]
    time_out = out[:, :, O_tot - 1:O_tot]
    return event_out, time_out


if __name__ == "__main__":
    # Small shapes consistent with the module.
    B, S = 2, 8
    input_size = 32          # embedding dim (embed_layer output feature size)
    lstm_hidden_size = 32
    hidden_size = 32
    output_size = 8
    num_layers = 2
    pre_len = 3
    vocab = 16

    key = jax.random.PRNGKey(0)
    k_params, k_time, k_events = jax.random.split(key, 3)

    params = init_params(k_params, vocab, input_size, lstm_hidden_size,
                         hidden_size, output_size, num_layers)

    input_time = jax.random.uniform(k_time, (B, S), dtype=jnp.float32)
    input_events = jax.random.randint(k_events, (B, S), 0, vocab, dtype=jnp.int32)
    valid_len = np.array([8, 6], dtype=np.int32)

    event_out, time_out = erpp_time_predictor_forward(
        params, input_time, input_events, valid_len, pre_len)
    jax.block_until_ready((event_out, time_out))

    assert event_out.shape == (B, pre_len - 1, output_size), event_out.shape
    assert time_out.shape == (B, pre_len - 1, 1), time_out.shape
    assert bool(jnp.all(jnp.isfinite(event_out))) and bool(jnp.all(jnp.isfinite(time_out)))
    print("KERNEL_OK")
</pallas_src>

<mosaic_0001>
module attributes {stable_mosaic.version = 11 : i64} {
  func.func @kernel(%arg0: i32, %arg1: memref<2xi32, #tpu.memory_space<smem>>, %arg2: memref<1x7x33xf32, #tpu.memory_space<vmem>>, %arg3: memref<33x128xf32, #tpu.memory_space<vmem>>, %arg4: memref<32x128xf32, #tpu.memory_space<vmem>>, %arg5: memref<1x128xf32, #tpu.memory_space<vmem>>, %arg6: memref<32x128xf32, #tpu.memory_space<vmem>>, %arg7: memref<32x128xf32, #tpu.memory_space<vmem>>, %arg8: memref<1x128xf32, #tpu.memory_space<vmem>>, %arg9: memref<32x128xf32, #tpu.memory_space<vmem>>, %arg10: memref<1x128xf32, #tpu.memory_space<vmem>>, %arg11: memref<1x2x128xf32, #tpu.memory_space<vmem>>, %arg12: memref<7x1x32xf32, #tpu.memory_space<vmem>>) attributes {dimension_semantics = [#tpu.dimension_semantics<parallel>], iteration_bounds = array<i64: 2>, scalar_prefetch = 1 : i64, scratch_operands = 1 : i64, tpu.core_type = #tpu.core_type<tc>, window_params = [{transform_indices = @transform_0, window_bounds = array<i64: 1, 7, 33>}, {pipeline_mode = #tpu.pipeline_mode<synchronous>, transform_indices = @transform_1, window_bounds = array<i64: 33, 128>}, {pipeline_mode = #tpu.pipeline_mode<synchronous>, transform_indices = @transform_2, window_bounds = array<i64: 32, 128>}, {pipeline_mode = #tpu.pipeline_mode<synchronous>, transform_indices = @transform_3, window_bounds = array<i64: 1, 128>}, {pipeline_mode = #tpu.pipeline_mode<synchronous>, transform_indices = @transform_4, window_bounds = array<i64: 32, 128>}, {pipeline_mode = #tpu.pipeline_mode<synchronous>, transform_indices = @transform_5, window_bounds = array<i64: 32, 128>}, {pipeline_mode = #tpu.pipeline_mode<synchronous>, transform_indices = @transform_6, window_bounds = array<i64: 1, 128>}, {pipeline_mode = #tpu.pipeline_mode<synchronous>, transform_indices = @transform_7, window_bounds = array<i64: 32, 128>}, {pipeline_mode = #tpu.pipeline_mode<synchronous>, transform_indices = @transform_8, window_bounds = array<i64: 1, 128>}, {transform_indices = @transform_9, window_bounds = array<i64: 1, 2, 128>}]} {
    %c0 = arith.constant 0 : index
    %c0_0 = arith.constant 0 : index
    %c0_1 = arith.constant 0 : index
    %0 = vector.load %arg2[%c0, %c0_0, %c0_1] : memref<1x7x33xf32, #tpu.memory_space<vmem>>, vector<1x7x33xf32>
    %1 = vector.shape_cast %0 : vector<1x7x33xf32> to vector<7x33xf32>
    %c0_2 = arith.constant 0 : index
    %c0_3 = arith.constant 0 : index
    %2 = vector.load %arg3[%c0_2, %c0_3] : memref<33x128xf32, #tpu.memory_space<vmem>>, vector<33x128xf32>
    %cst = arith.constant dense<0.000000e+00> : vector<7x128xf32>
    %3 = tpu.matmul %1, %2, %cst {dimension_numbers = #tpu.dot_dimension_numbers<[1], [0], [0], [1], [0, 0, 1, 1], [], []>} : vector<7x33xf32>, vector<33x128xf32>, vector<7x128xf32> -> vector<7x128xf32>
    %c0_4 = arith.constant 0 : index
    %c0_5 = arith.constant 0 : index
    %4 = vector.load %arg5[%c0_4, %c0_5] : memref<1x128xf32, #tpu.memory_space<vmem>>, vector<1x128xf32>
    %5 = vector.broadcast %4 : vector<1x128xf32> to vector<7x128xf32>
    %6 = arith.addf %3, %5 : vector<7x128xf32>
    %c0_6 = arith.constant 0 : index
    %c0_7 = arith.constant 0 : index
    %7 = vector.load %arg4[%c0_6, %c0_7] : memref<32x128xf32, #tpu.memory_space<vmem>>, vector<32x128xf32>
    %cst_8 = arith.constant 0.000000e+00 : f32
    %8 = vector.broadcast %cst_8 : f32 to vector<1x32xf32>
    %cst_9 = arith.constant 0.000000e+00 : f32
    %9 = vector.broadcast %cst_9 : f32 to vector<1x32xf32>
    %10 = vector.extract_strided_slice %6 {offsets = [0, 0], sizes = [1, 128], strides = [1, 1]} : vector<7x128xf32> to vector<1x128xf32>
    %cst_10 = arith.constant dense<0.000000e+00> : vector<1x128xf32>
    %11 = tpu.matmul %8, %7, %cst_10 {dimension_numbers = #tpu.dot_dimension_numbers<[1], [0], [0], [1], [0, 0, 1, 1], [], []>} : vector<1x32xf32>, vector<32x128xf32>, vector<1x128xf32> -> vector<1x128xf32>
    %12 = arith.addf %10, %11 : vector<1x128xf32>
    %13 = arith.negf %12 : vector<1x128xf32>
    %14 = math.exp %13 : vector<1x128xf32>
    %cst_11 = arith.constant 1.000000e+00 : f32
    %15 = vector.broadcast %cst_11 : f32 to vector<1x128xf32>
    %16 = arith.addf %15, %14 : vector<1x128xf32>
    %17 = arith.divf %15, %16 : vector<1x128xf32>
    %18 = vector.extract_strided_slice %17 {offsets = [0, 0], sizes = [1, 32], strides = [1, 1]} : vector<1x128xf32> to vector<1x32xf32>
    %19 = vector.extract_strided_slice %17 {offsets = [0, 32], sizes = [1, 32], strides = [1, 1]} : vector<1x128xf32> to vector<1x32xf32>
    %20 = vector.extract_strided_slice %17 {offsets = [0, 64], sizes = [1, 32], strides = [1, 1]} : vector<1x128xf32> to vector<1x32xf32>
    %21 = vector.extract_strided_slice %17 {offsets = [0, 96], sizes = [1, 32], strides = [1, 1]} : vector<1x128xf32> to vector<1x32xf32>
    %cst_12 = arith.constant 2.000000e+00 : f32
    %22 = vector.broadcast %cst_12 : f32 to vector<1x32xf32>
    %23 = arith.mulf %22, %21 : vector<1x32xf32>
    %cst_13 = arith.constant 1.000000e+00 : f32
    %24 = vector.broadcast %cst_13 : f32 to vector<1x32xf32>
    %25 = arith.subf %23, %24 : vector<1x32xf32>
    %26 = arith.mulf %19, %9 : vector<1x32xf32>
    %27 = arith.mulf %18, %25 : vector<1x32xf32>
    %28 = arith.addf %26, %27 : vector<1x32xf32>
    %29 = math.tanh %28 : vector<1x32xf32>
    %30 = arith.mulf %20, %29 : vector<1x32xf32>
    %31 = vector.extract_strided_slice %6 {offsets = [1, 0], sizes = [1, 128], strides = [1, 1]} : vector<7x128xf32> to vector<1x128xf32>
    %cst_14 = arith.constant dense<0.000000e+00> : vector<1x128xf32>
    %32 = tpu.matmul %30, %7, %cst_14 {dimension_numbers = #tpu.dot_dimension_numbers<[1], [0], [0], [1], [0, 0, 1, 1], [], []>} : vector<1x32xf32>, vector<32x128xf32>, vector<1x128xf32> -> vector<1x128xf32>
    %33 = arith.addf %31, %32 : vector<1x128xf32>
    %34 = arith.negf %33 : vector<1x128xf32>
    %35 = math.exp %34 : vector<1x128xf32>
    %cst_15 = arith.constant 1.000000e+00 : f32
    %36 = vector.broadcast %cst_15 : f32 to vector<1x128xf32>
    %37 = arith.addf %36, %35 : vector<1x128xf32>
    %38 = arith.divf %36, %37 : vector<1x128xf32>
    %39 = vector.extract_strided_slice %38 {offsets = [0, 0], sizes = [1, 32], strides = [1, 1]} : vector<1x128xf32> to vector<1x32xf32>
    %40 = vector.extract_strided_slice %38 {offsets = [0, 32], sizes = [1, 32], strides = [1, 1]} : vector<1x128xf32> to vector<1x32xf32>
    %41 = vector.extract_strided_slice %38 {offsets = [0, 64], sizes = [1, 32], strides = [1, 1]} : vector<1x128xf32> to vector<1x32xf32>
    %42 = vector.extract_strided_slice %38 {offsets = [0, 96], sizes = [1, 32], strides = [1, 1]} : vector<1x128xf32> to vector<1x32xf32>
    %cst_16 = arith.constant 2.000000e+00 : f32
    %43 = vector.broadcast %cst_16 : f32 to vector<1x32xf32>
    %44 = arith.mulf %43, %42 : vector<1x32xf32>
    %cst_17 = arith.constant 1.000000e+00 : f32
    %45 = vector.broadcast %cst_17 : f32 to vector<1x32xf32>
    %46 = arith.subf %44, %45 : vector<1x32xf32>
    %47 = arith.mulf %40, %28 : vector<1x32xf32>
    %48 = arith.mulf %39, %46 : vector<1x32xf32>
    %49 = arith.addf %47, %48 : vector<1x32xf32>
    %50 = math.tanh %49 : vector<1x32xf32>
    %51 = arith.mulf %41, %50 : vector<1x32xf32>
    %52 = vector.extract_strided_slice %6 {offsets = [2, 0], sizes = [1, 128], strides = [1, 1]} : vector<7x128xf32> to vector<1x128xf32>
    %cst_18 = arith.constant dense<0.000000e+00> : vector<1x128xf32>
    %53 = tpu.matmul %51, %7, %cst_18 {dimension_numbers = #tpu.dot_dimension_numbers<[1], [0], [0], [1], [0, 0, 1, 1], [], []>} : vector<1x32xf32>, vector<32x128xf32>, vector<1x128xf32> -> vector<1x128xf32>
    %54 = arith.addf %52, %53 : vector<1x128xf32>
    %55 = arith.negf %54 : vector<1x128xf32>
    %56 = math.exp %55 : vector<1x128xf32>
    %cst_19 = arith.constant 1.000000e+00 : f32
    %57 = vector.broadcast %cst_19 : f32 to vector<1x128xf32>
    %58 = arith.addf %57, %56 : vector<1x128xf32>
    %59 = arith.divf %57, %58 : vector<1x128xf32>
    %60 = vector.extract_strided_slice %59 {offsets = [0, 0], sizes = [1, 32], strides = [1, 1]} : vector<1x128xf32> to vector<1x32xf32>
    %61 = vector.extract_strided_slice %59 {offsets = [0, 32], sizes = [1, 32], strides = [1, 1]} : vector<1x128xf32> to vector<1x32xf32>
    %62 = vector.extract_strided_slice %59 {offsets = [0, 64], sizes = [1, 32], strides = [1, 1]} : vector<1x128xf32> to vector<1x32xf32>
    %63 = vector.extract_strided_slice %59 {offsets = [0, 96], sizes = [1, 32], strides = [1, 1]} : vector<1x128xf32> to vector<1x32xf32>
    %cst_20 = arith.constant 2.000000e+00 : f32
    %64 = vector.broadcast %cst_20 : f32 to vector<1x32xf32>
    %65 = arith.mulf %64, %63 : vector<1x32xf32>
    %cst_21 = arith.constant 1.000000e+00 : f32
    %66 = vector.broadcast %cst_21 : f32 to vector<1x32xf32>
    %67 = arith.subf %65, %66 : vector<1x32xf32>
    %68 = arith.mulf %61, %49 : vector<1x32xf32>
    %69 = arith.mulf %60, %67 : vector<1x32xf32>
    %70 = arith.addf %68, %69 : vector<1x32xf32>
    %71 = math.tanh %70 : vector<1x32xf32>
    %72 = arith.mulf %62, %71 : vector<1x32xf32>
    %73 = vector.extract_strided_slice %6 {offsets = [3, 0], sizes = [1, 128], strides = [1, 1]} : vector<7x128xf32> to vector<1x128xf32>
    %cst_22 = arith.constant dense<0.000000e+00> : vector<1x128xf32>
    %74 = tpu.matmul %72, %7, %cst_22 {dimension_numbers = #tpu.dot_dimension_numbers<[1], [0], [0], [1], [0, 0, 1, 1], [], []>} : vector<1x32xf32>, vector<32x128xf32>, vector<1x128xf32> -> vector<1x128xf32>
    %75 = arith.addf %73, %74 : vector<1x128xf32>
    %76 = arith.negf %75 : vector<1x128xf32>
    %77 = math.exp %76 : vector<1x128xf32>
    %cst_23 = arith.constant 1.000000e+00 : f32
    %78 = vector.broadcast %cst_23 : f32 to vector<1x128xf32>
    %79 = arith.addf %78, %77 : vector<1x128xf32>
    %80 = arith.divf %78, %79 : vector<1x128xf32>
    %81 = vector.extract_strided_slice %80 {offsets = [0, 0], sizes = [1, 32], strides = [1, 1]} : vector<1x128xf32> to vector<1x32xf32>
    %82 = vector.extract_strided_slice %80 {offsets = [0, 32], sizes = [1, 32], strides = [1, 1]} : vector<1x128xf32> to vector<1x32xf32>
    %83 = vector.extract_strided_slice %80 {offsets = [0, 64], sizes = [1, 32], strides = [1, 1]} : vector<1x128xf32> to vector<1x32xf32>
    %84 = vector.extract_strided_slice %80 {offsets = [0, 96], sizes = [1, 32], strides = [1, 1]} : vector<1x128xf32> to vector<1x32xf32>
    %cst_24 = arith.constant 2.000000e+00 : f32
    %85 = vector.broadcast %cst_24 : f32 to vector<1x32xf32>
    %86 = arith.mulf %85, %84 : vector<1x32xf32>
    %cst_25 = arith.constant 1.000000e+00 : f32
    %87 = vector.broadcast %cst_25 : f32 to vector<1x32xf32>
    %88 = arith.subf %86, %87 : vector<1x32xf32>
    %89 = arith.mulf %82, %70 : vector<1x32xf32>
    %90 = arith.mulf %81, %88 : vector<1x32xf32>
    %91 = arith.addf %89, %90 : vector<1x32xf32>
    %92 = math.tanh %91 : vector<1x32xf32>
    %93 = arith.mulf %83, %92 : vector<1x32xf32>
    %94 = vector.extract_strided_slice %6 {offsets = [4, 0], sizes = [1, 128], strides = [1, 1]} : vector<7x128xf32> to vector<1x128xf32>
    %cst_26 = arith.constant dense<0.000000e+00> : vector<1x128xf32>
    %95 = tpu.matmul %93, %7, %cst_26 {dimension_numbers = #tpu.dot_dimension_numbers<[1], [0], [0], [1], [0, 0, 1, 1], [], []>} : vector<1x32xf32>, vector<32x128xf32>, vector<1x128xf32> -> vector<1x128xf32>
    %96 = arith.addf %94, %95 : vector<1x128xf32>
    %97 = arith.negf %96 : vector<1x128xf32>
    %98 = math.exp %97 : vector<1x128xf32>
    %cst_27 = arith.constant 1.000000e+00 : f32
    %99 = vector.broadcast %cst_27 : f32 to vector<1x128xf32>
    %100 = arith.addf %99, %98 : vector<1x128xf32>
    %101 = arith.divf %99, %100 : vector<1x128xf32>
    %102 = vector.extract_strided_slice %101 {offsets = [0, 0], sizes = [1, 32], strides = [1, 1]} : vector<1x128xf32> to vector<1x32xf32>
    %103 = vector.extract_strided_slice %101 {offsets = [0, 32], sizes = [1, 32], strides = [1, 1]} : vector<1x128xf32> to vector<1x32xf32>
    %104 = vector.extract_strided_slice %101 {offsets = [0, 64], sizes = [1, 32], strides = [1, 1]} : vector<1x128xf32> to vector<1x32xf32>
    %105 = vector.extract_strided_slice %101 {offsets = [0, 96], sizes = [1, 32], strides = [1, 1]} : vector<1x128xf32> to vector<1x32xf32>
    %cst_28 = arith.constant 2.000000e+00 : f32
    %106 = vector.broadcast %cst_28 : f32 to vector<1x32xf32>
    %107 = arith.mulf %106, %105 : vector<1x32xf32>
    %cst_29 = arith.constant 1.000000e+00 : f32
    %108 = vector.broadcast %cst_29 : f32 to vector<1x32xf32>
    %109 = arith.subf %107, %108 : vector<1x32xf32>
    %110 = arith.mulf %103, %91 : vector<1x32xf32>
    %111 = arith.mulf %102, %109 : vector<1x32xf32>
    %112 = arith.addf %110, %111 : vector<1x32xf32>
    %113 = math.tanh %112 : vector<1x32xf32>
    %114 = arith.mulf %104, %113 : vector<1x32xf32>
    %115 = vector.extract_strided_slice %6 {offsets = [5, 0], sizes = [1, 128], strides = [1, 1]} : vector<7x128xf32> to vector<1x128xf32>
    %cst_30 = arith.constant dense<0.000000e+00> : vector<1x128xf32>
    %116 = tpu.matmul %114, %7, %cst_30 {dimension_numbers = #tpu.dot_dimension_numbers<[1], [0], [0], [1], [0, 0, 1, 1], [], []>} : vector<1x32xf32>, vector<32x128xf32>, vector<1x128xf32> -> vector<1x128xf32>
    %117 = arith.addf %115, %116 : vector<1x128xf32>
    %118 = arith.negf %117 : vector<1x128xf32>
    %119 = math.exp %118 : vector<1x128xf32>
    %cst_31 = arith.constant 1.000000e+00 : f32
    %120 = vector.broadcast %cst_31 : f32 to vector<1x128xf32>
    %121 = arith.addf %120, %119 : vector<1x128xf32>
    %122 = arith.divf %120, %121 : vector<1x128xf32>
    %123 = vector.extract_strided_slice %122 {offsets = [0, 0], sizes = [1, 32], strides = [1, 1]} : vector<1x128xf32> to vector<1x32xf32>
    %124 = vector.extract_strided_slice %122 {offsets = [0, 32], sizes = [1, 32], strides = [1, 1]} : vector<1x128xf32> to vector<1x32xf32>
    %125 = vector.extract_strided_slice %122 {offsets = [0, 64], sizes = [1, 32], strides = [1, 1]} : vector<1x128xf32> to vector<1x32xf32>
    %126 = vector.extract_strided_slice %122 {offsets = [0, 96], sizes = [1, 32], strides = [1, 1]} : vector<1x128xf32> to vector<1x32xf32>
    %cst_32 = arith.constant 2.000000e+00 : f32
    %127 = vector.broadcast %cst_32 : f32 to vector<1x32xf32>
    %128 = arith.mulf %127, %126 : vector<1x32xf32>
    %cst_33 = arith.constant 1.000000e+00 : f32
    %129 = vector.broadcast %cst_33 : f32 to vector<1x32xf32>
    %130 = arith.subf %128, %129 : vector<1x32xf32>
    %131 = arith.mulf %124, %112 : vector<1x32xf32>
    %132 = arith.mulf %123, %130 : vector<1x32xf32>
    %133 = arith.addf %131, %132 : vector<1x32xf32>
    %134 = math.tanh %133 : vector<1x32xf32>
    %135 = arith.mulf %125, %134 : vector<1x32xf32>
    %136 = vector.extract_strided_slice %6 {offsets = [6, 0], sizes = [1, 128], strides = [1, 1]} : vector<7x128xf32> to vector<1x128xf32>
    %cst_34 = arith.constant dense<0.000000e+00> : vector<1x128xf32>
    %137 = tpu.matmul %135, %7, %cst_34 {dimension_numbers = #tpu.dot_dimension_numbers<[1], [0], [0], [1], [0, 0, 1, 1], [], []>} : vector<1x32xf32>, vector<32x128xf32>, vector<1x128xf32> -> vector<1x128xf32>
    %138 = arith.addf %136, %137 : vector<1x128xf32>
    %139 = arith.negf %138 : vector<1x128xf32>
    %140 = math.exp %139 : vector<1x128xf32>
    %cst_35 = arith.constant 1.000000e+00 : f32
    %141 = vector.broadcast %cst_35 : f32 to vector<1x128xf32>
    %142 = arith.addf %141, %140 : vector<1x128xf32>
    %143 = arith.divf %141, %142 : vector<1x128xf32>
    %144 = vector.extract_strided_slice %143 {offsets = [0, 0], sizes = [1, 32], strides = [1, 1]} : vector<1x128xf32> to vector<1x32xf32>
    %145 = vector.extract_strided_slice %143 {offsets = [0, 32], sizes = [1, 32], strides = [1, 1]} : vector<1x128xf32> to vector<1x32xf32>
    %146 = vector.extract_strided_slice %143 {offsets = [0, 64], sizes = [1, 32], strides = [1, 1]} : vector<1x128xf32> to vector<1x32xf32>
    %147 = vector.extract_strided_slice %143 {offsets = [0, 96], sizes = [1, 32], strides = [1, 1]} : vector<1x128xf32> to vector<1x32xf32>
    %cst_36 = arith.constant 2.000000e+00 : f32
    %148 = vector.broadcast %cst_36 : f32 to vector<1x32xf32>
    %149 = arith.mulf %148, %147 : vector<1x32xf32>
    %cst_37 = arith.constant 1.000000e+00 : f32
    %150 = vector.broadcast %cst_37 : f32 to vector<1x32xf32>
    %151 = arith.subf %149, %150 : vector<1x32xf32>
    %152 = arith.mulf %145, %133 : vector<1x32xf32>
    %153 = arith.mulf %144, %151 : vector<1x32xf32>
    %154 = arith.addf %152, %153 : vector<1x32xf32>
    %155 = math.tanh %154 : vector<1x32xf32>
    %156 = arith.mulf %146, %155 : vector<1x32xf32>
    %157 = tpu.concatenate %30, %51, %72, %93, %114, %135, %156 in 0 : vector<1x32xf32>, vector<1x32xf32>, vector<1x32xf32>, vector<1x32xf32>, vector<1x32xf32>, vector<1x32xf32>, vector<1x32xf32> -> vector<7x32xf32>
    %c0_38 = arith.constant 0 : index
    %c0_39 = arith.constant 0 : index
    %158 = vector.load %arg6[%c0_38, %c0_39] : memref<32x128xf32, #tpu.memory_space<vmem>>, vector<32x128xf32>
    %cst_40 = arith.constant dense<0.000000e+00> : vector<7x128xf32>
    %159 = tpu.matmul %157, %158, %cst_40 {dimension_numbers = #tpu.dot_dimension_numbers<[1], [0], [0], [1], [0, 0, 1, 1], [], []>} : vector<7x32xf32>, vector<32x128xf32>, vector<7x128xf32> -> vector<7x128xf32>
    %c0_41 = arith.constant 0 : index
    %c0_42 = arith.constant 0 : index
    %160 = vector.load %arg8[%c0_41, %c0_42] : memref<1x128xf32, #tpu.memory_space<vmem>>, vector<1x128xf32>
    %161 = vector.broadcast %160 : vector<1x128xf32> to vector<7x128xf32>
    %162 = arith.addf %159, %161 : vector<7x128xf32>
    %c0_43 = arith.constant 0 : index
    %c0_44 = arith.constant 0 : index
    %163 = vector.load %arg7[%c0_43, %c0_44] : memref<32x128xf32, #tpu.memory_space<vmem>>, vector<32x128xf32>
    %cst_45 = arith.constant 0.000000e+00 : f32
    %164 = vector.broadcast %cst_45 : f32 to vector<1x32xf32>
    %cst_46 = arith.constant 0.000000e+00 : f32
    %165 = vector.broadcast %cst_46 : f32 to vector<1x32xf32>
    %166 = vector.extract_strided_slice %162 {offsets = [0, 0], sizes = [1, 128], strides = [1, 1]} : vector<7x128xf32> to vector<1x128xf32>
    %cst_47 = arith.constant dense<0.000000e+00> : vector<1x128xf32>
    %167 = tpu.matmul %164, %163, %cst_47 {dimension_numbers = #tpu.dot_dimension_numbers<[1], [0], [0], [1], [0, 0, 1, 1], [], []>} : vector<1x32xf32>, vector<32x128xf32>, vector<1x128xf32> -> vector<1x128xf32>
    %168 = arith.addf %166, %167 : vector<1x128xf32>
    %169 = arith.negf %168 : vector<1x128xf32>
    %170 = math.exp %169 : vector<1x128xf32>
    %cst_48 = arith.constant 1.000000e+00 : f32
    %171 = vector.broadcast %cst_48 : f32 to vector<1x128xf32>
    %172 = arith.addf %171, %170 : vector<1x128xf32>
    %173 = arith.divf %171, %172 : vector<1x128xf32>
    %174 = vector.extract_strided_slice %173 {offsets = [0, 0], sizes = [1, 32], strides = [1, 1]} : vector<1x128xf32> to vector<1x32xf32>
    %175 = vector.extract_strided_slice %173 {offsets = [0, 32], sizes = [1, 32], strides = [1, 1]} : vector<1x128xf32> to vector<1x32xf32>
    %176 = vector.extract_strided_slice %173 {offsets = [0, 64], sizes = [1, 32], strides = [1, 1]} : vector<1x128xf32> to vector<1x32xf32>
    %177 = vector.extract_strided_slice %173 {offsets = [0, 96], sizes = [1, 32], strides = [1, 1]} : vector<1x128xf32> to vector<1x32xf32>
    %cst_49 = arith.constant 2.000000e+00 : f32
    %178 = vector.broadcast %cst_49 : f32 to vector<1x32xf32>
    %179 = arith.mulf %178, %177 : vector<1x32xf32>
    %cst_50 = arith.constant 1.000000e+00 : f32
    %180 = vector.broadcast %cst_50 : f32 to vector<1x32xf32>
    %181 = arith.subf %179, %180 : vector<1x32xf32>
    %182 = arith.mulf %175, %165 : vector<1x32xf32>
    %183 = arith.mulf %174, %181 : vector<1x32xf32>
    %184 = arith.addf %182, %183 : vector<1x32xf32>
    %185 = math.tanh %184 : vector<1x32xf32>
    %186 = arith.mulf %176, %185 : vector<1x32xf32>
    %c0_51 = arith.constant 0 : index
    %c0_52 = arith.constant 0 : index
    %c0_53 = arith.constant 0 : index
    %187 = vector.load %arg12[%c0_51, %c0_52, %c0_53] : memref<7x1x32xf32, #tpu.memory_space<vmem>>, vector<1x1x32xf32>
    %188 = vector.shape_cast %187 : vector<1x1x32xf32> to vector<1x32xf32>
    %189 = vector.shape_cast %186 : vector<1x32xf32> to vector<1x1x32xf32>
    tpu.vector_store %arg12[%c0_51, %c0_52, %c0_53], %189 {strides = array<i32>} : memref<7x1x32xf32, #tpu.memory_space<vmem>>, vector<1x1x32xf32>,
    %190 = vector.extract_strided_slice %162 {offsets = [1, 0], sizes = [1, 128], strides = [1, 1]} : vector<7x128xf32> to vector<1x128xf32>
    %cst_54 = arith.constant dense<0.000000e+00> : vector<1x128xf32>
    %191 = tpu.matmul %186, %163, %cst_54 {dimension_numbers = #tpu.dot_dimension_numbers<[1], [0], [0], [1], [0, 0, 1, 1], [], []>} : vector<1x32xf32>, vector<32x128xf32>, vector<1x128xf32> -> vector<1x128xf32>
    %192 = arith.addf %190, %191 : vector<1x128xf32>
    %193 = arith.negf %192 : vector<1x128xf32>
    %194 = math.exp %193 : vector<1x128xf32>
    %cst_55 = arith.constant 1.000000e+00 : f32
    %195 = vector.broadcast %cst_55 : f32 to vector<1x128xf32>
    %196 = arith.addf %195, %194 : vector<1x128xf32>
    %197 = arith.divf %195, %196 : vector<1x128xf32>
    %198 = vector.extract_strided_slice %197 {offsets = [0, 0], sizes = [1, 32], strides = [1, 1]} : vector<1x128xf32> to vector<1x32xf32>
    %199 = vector.extract_strided_slice %197 {offsets = [0, 32], sizes = [1, 32], strides = [1, 1]} : vector<1x128xf32> to vector<1x32xf32>
    %200 = vector.extract_strided_slice %197 {offsets = [0, 64], sizes = [1, 32], strides = [1, 1]} : vector<1x128xf32> to vector<1x32xf32>
    %201 = vector.extract_strided_slice %197 {offsets = [0, 96], sizes = [1, 32], strides = [1, 1]} : vector<1x128xf32> to vector<1x32xf32>
    %cst_56 = arith.constant 2.000000e+00 : f32
    %202 = vector.broadcast %cst_56 : f32 to vector<1x32xf32>
    %203 = arith.mulf %202, %201 : vector<1x32xf32>
    %cst_57 = arith.constant 1.000000e+00 : f32
    %204 = vector.broadcast %cst_57 : f32 to vector<1x32xf32>
    %205 = arith.subf %203, %204 : vector<1x32xf32>
    %206 = arith.mulf %199, %184 : vector<1x32xf32>
    %207 = arith.mulf %198, %205 : vector<1x32xf32>
    %208 = arith.addf %206, %207 : vector<1x32xf32>
    %209 = math.tanh %208 : vector<1x32xf32>
    %210 = arith.mulf %200, %209 : vector<1x32xf32>
    %c1 = arith.constant 1 : index
    %c0_58 = arith.constant 0 : index
    %c0_59 = arith.constant 0 : index
    %211 = vector.load %arg12[%c1, %c0_58, %c0_59] : memref<7x1x32xf32, #tpu.memory_space<vmem>>, vector<1x1x32xf32>
    %212 = vector.shape_cast %211 : vector<1x1x32xf32> to vector<1x32xf32>
    %213 = vector.shape_cast %210 : vector<1x32xf32> to vector<1x1x32xf32>
    tpu.vector_store %arg12[%c1, %c0_58, %c0_59], %213 {strides = array<i32>} : memref<7x1x32xf32, #tpu.memory_space<vmem>>, vector<1x1x32xf32>,
    %214 = vector.extract_strided_slice %162 {offsets = [2, 0], sizes = [1, 128], strides = [1, 1]} : vector<7x128xf32> to vector<1x128xf32>
    %cst_60 = arith.constant dense<0.000000e+00> : vector<1x128xf32>
    %215 = tpu.matmul %210, %163, %cst_60 {dimension_numbers = #tpu.dot_dimension_numbers<[1], [0], [0], [1], [0, 0, 1, 1], [], []>} : vector<1x32xf32>, vector<32x128xf32>, vector<1x128xf32> -> vector<1x128xf32>
    %216 = arith.addf %214, %215 : vector<1x128xf32>
    %217 = arith.negf %216 : vector<1x128xf32>
    %218 = math.exp %217 : vector<1x128xf32>
    %cst_61 = arith.constant 1.000000e+00 : f32
    %219 = vector.broadcast %cst_61 : f32 to vector<1x128xf32>
    %220 = arith.addf %219, %218 : vector<1x128xf32>
    %221 = arith.divf %219, %220 : vector<1x128xf32>
    %222 = vector.extract_strided_slice %221 {offsets = [0, 0], sizes = [1, 32], strides = [1, 1]} : vector<1x128xf32> to vector<1x32xf32>
    %223 = vector.extract_strided_slice %221 {offsets = [0, 32], sizes = [1, 32], strides = [1, 1]} : vector<1x128xf32> to vector<1x32xf32>
    %224 = vector.extract_strided_slice %221 {offsets = [0, 64], sizes = [1, 32], strides = [1, 1]} : vector<1x128xf32> to vector<1x32xf32>
    %225 = vector.extract_strided_slice %221 {offsets = [0, 96], sizes = [1, 32], strides = [1, 1]} : vector<1x128xf32> to vector<1x32xf32>
    %cst_62 = arith.constant 2.000000e+00 : f32
    %226 = vector.broadcast %cst_62 : f32 to vector<1x32xf32>
    %227 = arith.mulf %226, %225 : vector<1x32xf32>
    %cst_63 = arith.constant 1.000000e+00 : f32
    %228 = vector.broadcast %cst_63 : f32 to vector<1x32xf32>
    %229 = arith.subf %227, %228 : vector<1x32xf32>
    %230 = arith.mulf %223, %208 : vector<1x32xf32>
    %231 = arith.mulf %222, %229 : vector<1x32xf32>
    %232 = arith.addf %230, %231 : vector<1x32xf32>
    %233 = math.tanh %232 : vector<1x32xf32>
    %234 = arith.mulf %224, %233 : vector<1x32xf32>
    %c2 = arith.constant 2 : index
    %c0_64 = arith.constant 0 : index
    %c0_65 = arith.constant 0 : index
    %235 = vector.load %arg12[%c2, %c0_64, %c0_65] : memref<7x1x32xf32, #tpu.memory_space<vmem>>, vector<1x1x32xf32>
    %236 = vector.shape_cast %235 : vector<1x1x32xf32> to vector<1x32xf32>
    %237 = vector.shape_cast %234 : vector<1x32xf32> to vector<1x1x32xf32>
    tpu.vector_store %arg12[%c2, %c0_64, %c0_65], %237 {strides = array<i32>} : memref<7x1x32xf32, #tpu.memory_space<vmem>>, vector<1x1x32xf32>,
    %238 = vector.extract_strided_slice %162 {offsets = [3, 0], sizes = [1, 128], strides = [1, 1]} : vector<7x128xf32> to vector<1x128xf32>
    %cst_66 = arith.constant dense<0.000000e+00> : vector<1x128xf32>
    %239 = tpu.matmul %234, %163, %cst_66 {dimension_numbers = #tpu.dot_dimension_numbers<[1], [0], [0], [1], [0, 0, 1, 1], [], []>} : vector<1x32xf32>, vector<32x128xf32>, vector<1x128xf32> -> vector<1x128xf32>
    %240 = arith.addf %238, %239 : vector<1x128xf32>
    %241 = arith.negf %240 : vector<1x128xf32>
    %242 = math.exp %241 : vector<1x128xf32>
    %cst_67 = arith.constant 1.000000e+00 : f32
    %243 = vector.broadcast %cst_67 : f32 to vector<1x128xf32>
    %244 = arith.addf %243, %242 : vector<1x128xf32>
    %245 = arith.divf %243, %244 : vector<1x128xf32>
    %246 = vector.extract_strided_slice %245 {offsets = [0, 0], sizes = [1, 32], strides = [1, 1]} : vector<1x128xf32> to vector<1x32xf32>
    %247 = vector.extract_strided_slice %245 {offsets = [0, 32], sizes = [1, 32], strides = [1, 1]} : vector<1x128xf32> to vector<1x32xf32>
    %248 = vector.extract_strided_slice %245 {offsets = [0, 64], sizes = [1, 32], strides = [1, 1]} : vector<1x128xf32> to vector<1x32xf32>
    %249 = vector.extract_strided_slice %245 {offsets = [0, 96], sizes = [1, 32], strides = [1, 1]} : vector<1x128xf32> to vector<1x32xf32>
    %cst_68 = arith.constant 2.000000e+00 : f32
    %250 = vector.broadcast %cst_68 : f32 to vector<1x32xf32>
    %251 = arith.mulf %250, %249 : vector<1x32xf32>
    %cst_69 = arith.constant 1.000000e+00 : f32
    %252 = vector.broadcast %cst_69 : f32 to vector<1x32xf32>
    %253 = arith.subf %251, %252 : vector<1x32xf32>
    %254 = arith.mulf %247, %232 : vector<1x32xf32>
    %255 = arith.mulf %246, %253 : vector<1x32xf32>
    %256 = arith.addf %254, %255 : vector<1x32xf32>
    %257 = math.tanh %256 : vector<1x32xf32>
    %258 = arith.mulf %248, %257 : vector<1x32xf32>
    %c3 = arith.constant 3 : index
    %c0_70 = arith.constant 0 : index
    %c0_71 = arith.constant 0 : index
    %259 = vector.load %arg12[%c3, %c0_70, %c0_71] : memref<7x1x32xf32, #tpu.memory_space<vmem>>, vector<1x1x32xf32>
    %260 = vector.shape_cast %259 : vector<1x1x32xf32> to vector<1x32xf32>
    %261 = vector.shape_cast %258 : vector<1x32xf32> to vector<1x1x32xf32>
    tpu.vector_store %arg12[%c3, %c0_70, %c0_71], %261 {strides = array<i32>} : memref<7x1x32xf32, #tpu.memory_space<vmem>>, vector<1x1x32xf32>,
    %262 = vector.extract_strided_slice %162 {offsets = [4, 0], sizes = [1, 128], strides = [1, 1]} : vector<7x128xf32> to vector<1x128xf32>
    %cst_72 = arith.constant dense<0.000000e+00> : vector<1x128xf32>
    %263 = tpu.matmul %258, %163, %cst_72 {dimension_numbers = #tpu.dot_dimension_numbers<[1], [0], [0], [1], [0, 0, 1, 1], [], []>} : vector<1x32xf32>, vector<32x128xf32>, vector<1x128xf32> -> vector<1x128xf32>
    %264 = arith.addf %262, %263 : vector<1x128xf32>
    %265 = arith.negf %264 : vector<1x128xf32>
    %266 = math.exp %265 : vector<1x128xf32>
    %cst_73 = arith.constant 1.000000e+00 : f32
    %267 = vector.broadcast %cst_73 : f32 to vector<1x128xf32>
    %268 = arith.addf %267, %266 : vector<1x128xf32>
    %269 = arith.divf %267, %268 : vector<1x128xf32>
    %270 = vector.extract_strided_slice %269 {offsets = [0, 0], sizes = [1, 32], strides = [1, 1]} : vector<1x128xf32> to vector<1x32xf32>
    %271 = vector.extract_strided_slice %269 {offsets = [0, 32], sizes = [1, 32], strides = [1, 1]} : vector<1x128xf32> to vector<1x32xf32>
    %272 = vector.extract_strided_slice %269 {offsets = [0, 64], sizes = [1, 32], strides = [1, 1]} : vector<1x128xf32> to vector<1x32xf32>
    %273 = vector.extract_strided_slice %269 {offsets = [0, 96], sizes = [1, 32], strides = [1, 1]} : vector<1x128xf32> to vector<1x32xf32>
    %cst_74 = arith.constant 2.000000e+00 : f32
    %274 = vector.broadcast %cst_74 : f32 to vector<1x32xf32>
    %275 = arith.mulf %274, %273 : vector<1x32xf32>
    %cst_75 = arith.constant 1.000000e+00 : f32
    %276 = vector.broadcast %cst_75 : f32 to vector<1x32xf32>
    %277 = arith.subf %275, %276 : vector<1x32xf32>
    %278 = arith.mulf %271, %256 : vector<1x32xf32>
    %279 = arith.mulf %270, %277 : vector<1x32xf32>
    %280 = arith.addf %278, %279 : vector<1x32xf32>
    %281 = math.tanh %280 : vector<1x32xf32>
    %282 = arith.mulf %272, %281 : vector<1x32xf32>
    %c4 = arith.constant 4 : index
    %c0_76 = arith.constant 0 : index
    %c0_77 = arith.constant 0 : index
    %283 = vector.load %arg12[%c4, %c0_76, %c0_77] : memref<7x1x32xf32, #tpu.memory_space<vmem>>, vector<1x1x32xf32>
    %284 = vector.shape_cast %283 : vector<1x1x32xf32> to vector<1x32xf32>
    %285 = vector.shape_cast %282 : vector<1x32xf32> to vector<1x1x32xf32>
    tpu.vector_store %arg12[%c4, %c0_76, %c0_77], %285 {strides = array<i32>} : memref<7x1x32xf32, #tpu.memory_space<vmem>>, vector<1x1x32xf32>,
    %286 = vector.extract_strided_slice %162 {offsets = [5, 0], sizes = [1, 128], strides = [1, 1]} : vector<7x128xf32> to vector<1x128xf32>
    %cst_78 = arith.constant dense<0.000000e+00> : vector<1x128xf32>
    %287 = tpu.matmul %282, %163, %cst_78 {dimension_numbers = #tpu.dot_dimension_numbers<[1], [0], [0], [1], [0, 0, 1, 1], [], []>} : vector<1x32xf32>, vector<32x128xf32>, vector<1x128xf32> -> vector<1x128xf32>
    %288 = arith.addf %286, %287 : vector<1x128xf32>
    %289 = arith.negf %288 : vector<1x128xf32>
    %290 = math.exp %289 : vector<1x128xf32>
    %cst_79 = arith.constant 1.000000e+00 : f32
    %291 = vector.broadcast %cst_79 : f32 to vector<1x128xf32>
    %292 = arith.addf %291, %290 : vector<1x128xf32>
    %293 = arith.divf %291, %292 : vector<1x128xf32>
    %294 = vector.extract_strided_slice %293 {offsets = [0, 0], sizes = [1, 32], strides = [1, 1]} : vector<1x128xf32> to vector<1x32xf32>
    %295 = vector.extract_strided_slice %293 {offsets = [0, 32], sizes = [1, 32], strides = [1, 1]} : vector<1x128xf32> to vector<1x32xf32>
    %296 = vector.extract_strided_slice %293 {offsets = [0, 64], sizes = [1, 32], strides = [1, 1]} : vector<1x128xf32> to vector<1x32xf32>
    %297 = vector.extract_strided_slice %293 {offsets = [0, 96], sizes = [1, 32], strides = [1, 1]} : vector<1x128xf32> to vector<1x32xf32>
    %cst_80 = arith.constant 2.000000e+00 : f32
    %298 = vector.broadcast %cst_80 : f32 to vector<1x32xf32>
    %299 = arith.mulf %298, %297 : vector<1x32xf32>
    %cst_81 = arith.constant 1.000000e+00 : f32
    %300 = vector.broadcast %cst_81 : f32 to vector<1x32xf32>
    %301 = arith.subf %299, %300 : vector<1x32xf32>
    %302 = arith.mulf %295, %280 : vector<1x32xf32>
    %303 = arith.mulf %294, %301 : vector<1x32xf32>
    %304 = arith.addf %302, %303 : vector<1x32xf32>
    %305 = math.tanh %304 : vector<1x32xf32>
    %306 = arith.mulf %296, %305 : vector<1x32xf32>
    %c5 = arith.constant 5 : index
    %c0_82 = arith.constant 0 : index
    %c0_83 = arith.constant 0 : index
    %307 = vector.load %arg12[%c5, %c0_82, %c0_83] : memref<7x1x32xf32, #tpu.memory_space<vmem>>, vector<1x1x32xf32>
    %308 = vector.shape_cast %307 : vector<1x1x32xf32> to vector<1x32xf32>
    %309 = vector.shape_cast %306 : vector<1x32xf32> to vector<1x1x32xf32>
    tpu.vector_store %arg12[%c5, %c0_82, %c0_83], %309 {strides = array<i32>} : memref<7x1x32xf32, #tpu.memory_space<vmem>>, vector<1x1x32xf32>,
    %310 = vector.extract_strided_slice %162 {offsets = [6, 0], sizes = [1, 128], strides = [1, 1]} : vector<7x128xf32> to vector<1x128xf32>
    %cst_84 = arith.constant dense<0.000000e+00> : vector<1x128xf32>
    %311 = tpu.matmul %306, %163, %cst_84 {dimension_numbers = #tpu.dot_dimension_numbers<[1], [0], [0], [1], [0, 0, 1, 1], [], []>} : vector<1x32xf32>, vector<32x128xf32>, vector<1x128xf32> -> vector<1x128xf32>
    %312 = arith.addf %310, %311 : vector<1x128xf32>
    %313 = arith.negf %312 : vector<1x128xf32>
    %314 = math.exp %313 : vector<1x128xf32>
    %cst_85 = arith.constant 1.000000e+00 : f32
    %315 = vector.broadcast %cst_85 : f32 to vector<1x128xf32>
    %316 = arith.addf %315, %314 : vector<1x128xf32>
    %317 = arith.divf %315, %316 : vector<1x128xf32>
    %318 = vector.extract_strided_slice %317 {offsets = [0, 0], sizes = [1, 32], strides = [1, 1]} : vector<1x128xf32> to vector<1x32xf32>
    %319 = vector.extract_strided_slice %317 {offsets = [0, 32], sizes = [1, 32], strides = [1, 1]} : vector<1x128xf32> to vector<1x32xf32>
    %320 = vector.extract_strided_slice %317 {offsets = [0, 64], sizes = [1, 32], strides = [1, 1]} : vector<1x128xf32> to vector<1x32xf32>
    %321 = vector.extract_strided_slice %317 {offsets = [0, 96], sizes = [1, 32], strides = [1, 1]} : vector<1x128xf32> to vector<1x32xf32>
    %cst_86 = arith.constant 2.000000e+00 : f32
    %322 = vector.broadcast %cst_86 : f32 to vector<1x32xf32>
    %323 = arith.mulf %322, %321 : vector<1x32xf32>
    %cst_87 = arith.constant 1.000000e+00 : f32
    %324 = vector.broadcast %cst_87 : f32 to vector<1x32xf32>
    %325 = arith.subf %323, %324 : vector<1x32xf32>
    %326 = arith.mulf %319, %304 : vector<1x32xf32>
    %327 = arith.mulf %318, %325 : vector<1x32xf32>
    %328 = arith.addf %326, %327 : vector<1x32xf32>
    %329 = math.tanh %328 : vector<1x32xf32>
    %330 = arith.mulf %320, %329 : vector<1x32xf32>
    %c6 = arith.constant 6 : index
    %c0_88 = arith.constant 0 : index
    %c0_89 = arith.constant 0 : index
    %331 = vector.load %arg12[%c6, %c0_88, %c0_89] : memref<7x1x32xf32, #tpu.memory_space<vmem>>, vector<1x1x32xf32>
    %332 = vector.shape_cast %331 : vector<1x1x32xf32> to vector<1x32xf32>
    %333 = vector.shape_cast %330 : vector<1x32xf32> to vector<1x1x32xf32>
    tpu.vector_store %arg12[%c6, %c0_88, %c0_89], %333 {strides = array<i32>} : memref<7x1x32xf32, #tpu.memory_space<vmem>>, vector<1x1x32xf32>,
    %c1_i32 = arith.constant 1 : i32
    %334 = arith.muli %arg0, %c1_i32 : i32
    %c0_i32 = arith.constant 0 : i32
    %335 = arith.addi %334, %c0_i32 : i32
    %336 = arith.index_cast %335 : i32 to index
    %337 = memref.load %arg1[%336] : memref<2xi32, #tpu.memory_space<smem>>
    %338 = arith.index_cast %337 : i32 to index
    %c0_90 = arith.constant 0 : index
    %c0_91 = arith.constant 0 : index
    %339 = vector.load %arg12[%338, %c0_90, %c0_91] : memref<7x1x32xf32, #tpu.memory_space<vmem>>, vector<2x1x32xf32>
    %340 = vector.shape_cast %339 : vector<2x1x32xf32> to vector<2x32xf32>
    %341 = math.tanh %340 : vector<2x32xf32>
    %c0_92 = arith.constant 0 : index
    %c0_93 = arith.constant 0 : index
    %342 = vector.load %arg9[%c0_92, %c0_93] : memref<32x128xf32, #tpu.memory_space<vmem>>, vector<32x128xf32>
    %cst_94 = arith.constant dense<0.000000e+00> : vector<2x128xf32>
    %343 = tpu.matmul %341, %342, %cst_94 {dimension_numbers = #tpu.dot_dimension_numbers<[1], [0], [0], [1], [0, 0, 1, 1], [], []>} : vector<2x32xf32>, vector<32x128xf32>, vector<2x128xf32> -> vector<2x128xf32>
    %c0_95 = arith.constant 0 : index
    %c0_96 = arith.constant 0 : index
    %344 = vector.load %arg10[%c0_95, %c0_96] : memref<1x128xf32, #tpu.memory_space<vmem>>, vector<1x128xf32>
    %345 = vector.broadcast %344 : vector<1x128xf32> to vector<2x128xf32>
    %346 = arith.addf %343, %345 : vector<2x128xf32>
    %347 = vector.shape_cast %346 : vector<2x128xf32> to vector<1x2x128xf32>
    %c0_97 = arith.constant 0 : index
    %c0_98 = arith.constant 0 : index
    %c0_99 = arith.constant 0 : index
    %348 = vector.load %arg11[%c0_97, %c0_98, %c0_99] : memref<1x2x128xf32, #tpu.memory_space<vmem>>, vector<1x2x128xf32>
    tpu.vector_store %arg11[%c0_97, %c0_98, %c0_99], %347 {strides = array<i32>} : memref<1x2x128xf32, #tpu.memory_space<vmem>>, vector<1x2x128xf32>,
    return
  }
  func.func @transform_0(%arg0: i32, %arg1: memref<2xi32, #tpu.memory_space<smem>>) -> (i32, i32, i32) {
    %c0_i32 = arith.constant 0 : i32
    %c0_i32_0 = arith.constant 0 : i32
    %c0_i32_1 = arith.constant 0 : i32
    return %arg0, %c0_i32, %c0_i32_0 : i32, i32, i32
  }
  func.func @transform_1(%arg0: i32, %arg1: memref<2xi32, #tpu.memory_space<smem>>) -> (i32, i32) {
    %c0_i32 = arith.constant 0 : i32
    %c0_i32_0 = arith.constant 0 : i32
    %c0_i32_1 = arith.constant 0 : i32
    return %c0_i32, %c0_i32_0 : i32, i32
  }
  func.func @transform_2(%arg0: i32, %arg1: memref<2xi32, #tpu.memory_space<smem>>) -> (i32, i32) {
    %c0_i32 = arith.constant 0 : i32
    %c0_i32_0 = arith.constant 0 : i32
    %c0_i32_1 = arith.constant 0 : i32
    return %c0_i32, %c0_i32_0 : i32, i32
  }
  func.func @transform_3(%arg0: i32, %arg1: memref<2xi32, #tpu.memory_space<smem>>) -> (i32, i32) {
    %c0_i32 = arith.constant 0 : i32
    %c0_i32_0 = arith.constant 0 : i32
    %c0_i32_1 = arith.constant 0 : i32
    return %c0_i32, %c0_i32_0 : i32, i32
  }
  func.func @transform_4(%arg0: i32, %arg1: memref<2xi32, #tpu.memory_space<smem>>) -> (i32, i32) {
    %c0_i32 = arith.constant 0 : i32
    %c0_i32_0 = arith.constant 0 : i32
    %c0_i32_1 = arith.constant 0 : i32
    return %c0_i32, %c0_i32_0 : i32, i32
  }
  func.func @transform_5(%arg0: i32, %arg1: memref<2xi32, #tpu.memory_space<smem>>) -> (i32, i32) {
    %c0_i32 = arith.constant 0 : i32
    %c0_i32_0 = arith.constant 0 : i32
    %c0_i32_1 = arith.constant 0 : i32
    return %c0_i32, %c0_i32_0 : i32, i32
  }
  func.func @transform_6(%arg0: i32, %arg1: memref<2xi32, #tpu.memory_space<smem>>) -> (i32, i32) {
    %c0_i32 = arith.constant 0 : i32
    %c0_i32_0 = arith.constant 0 : i32
    %c0_i32_1 = arith.constant 0 : i32
    return %c0_i32, %c0_i32_0 : i32, i32
  }
  func.func @transform_7(%arg0: i32, %arg1: memref<2xi32, #tpu.memory_space<smem>>) -> (i32, i32) {
    %c0_i32 = arith.constant 0 : i32
    %c0_i32_0 = arith.constant 0 : i32
    %c0_i32_1 = arith.constant 0 : i32
    return %c0_i32, %c0_i32_0 : i32, i32
  }
  func.func @transform_8(%arg0: i32, %arg1: memref<2xi32, #tpu.memory_space<smem>>) -> (i32, i32) {
    %c0_i32 = arith.constant 0 : i32
    %c0_i32_0 = arith.constant 0 : i32
    %c0_i32_1 = arith.constant 0 : i32
    return %c0_i32, %c0_i32_0 : i32, i32
  }
  func.func @transform_9(%arg0: i32, %arg1: memref<2xi32, #tpu.memory_space<smem>>) -> (i32, i32, i32) {
    %c0_i32 = arith.constant 0 : i32
    %c0_i32_0 = arith.constant 0 : i32
    %c0_i32_1 = arith.constant 0 : i32
    return %arg0, %c0_i32, %c0_i32_0 : i32, i32, i32
  }
}

</mosaic_0001>

<llo_original>
// kernel: tpu_custom_call.1
$region0: #{tpu_custom_call.1}
  #allocation0 [shape = 'u32[]', space=smem, size = 0x4, offset = 0x4, fixed_abs, tag = 'smem constant byte address 0x4 - core index']
  #allocation1 [shape = 'u32[144,128]{1,0:T(1,128)}', space=vmem, size = 0x12000, scoped, tag = 'internal scratch']
  #allocation2 [shape = 'f32[7,1,32]{2,1,0:T(1,128)}', space=vmem, size = 0xe00, scoped, tag = 'scratch operand']
  #allocation3 [shape = 's32[1]{0}', space=sflag, size = 0x4, scoped, tag = 'scoped memory for tpu_custom_call.1']
  #allocation4 [shape = 'u8[512]{0}', space=smem, size = 0x200, scoped, tag = 'prefetched SMEM operand 0']
  %s0 = inlined_call_operand.vmem [shape: s32[2], index: 0, kind: input, shape index: {}]
  %s1 = inlined_call_operand.vmem [shape: f32[2,7,33], index: 1, kind: input, shape index: {}]
  %s2 = inlined_call_operand.hbm [shape: f32[33,128], index: 2, kind: input, shape index: {}]
  %s3 = inlined_call_operand.vmem [shape: f32[32,128], index: 3, kind: input, shape index: {}]
  %s4 = inlined_call_operand.vmem [shape: f32[1,128], index: 4, kind: input, shape index: {}]
  %s5 = inlined_call_operand.hbm [shape: f32[32,128], index: 5, kind: input, shape index: {}]
  %s6 = inlined_call_operand.hbm [shape: f32[32,128], index: 6, kind: input, shape index: {}]
  %s7 = inlined_call_operand.vmem [shape: f32[1,128], index: 7, kind: input, shape index: {}]
  %s8 = inlined_call_operand.hbm [shape: f32[32,128], index: 8, kind: input, shape index: {}]
  %s9 = inlined_call_operand.vmem [shape: f32[1,128], index: 9, kind: input, shape index: {}]
  %s10 = inlined_call_operand.hbm [shape: f32[2,2,128], index: 10, kind: output, shape index: {}]
  %s11 = sld [smem:[#allocation0]]
  $region85: #{tpu_custom_call.1} parent=0
    _
  %s13 = ssub.s32 1, %s11
  %s14 = scalar_select 0, %s13, %s11
  %s15 = sshll.u32 %s0, 4
  %s16 = int_to_ptr.vmem [resolvable:$true] %s15
  %18 = dma.vmem_to_smem %s16, 16, [#allocation4], [#allocation3]
  %19 = dma.done [#allocation3], 16
  %20 = sfence
  $region1: #{tpu_custom_call.1} parent=0
    #allocation5 [shape = 'u8[20480]{0}', space=vmem, size = 0x5000, scoped, tag = 'input window, operand 2, single buffered']
    #allocation6 [shape = 's32[2]{0}', space=sflag, size = 0x8, scoped, tag = 'scoped memory for tpu_custom_call.1']
    #allocation7 [shape = 's32[2]{0}', space=sflag, size = 0x8, scoped, tag = 'scoped memory for tpu_custom_call.1']
    #allocation8 [shape = 'u8[16384]{0}', space=vmem, size = 0x4000, scoped, tag = 'input window, operand 5, single buffered']
    #allocation9 [shape = 's32[1]{0}', space=sflag, size = 0x4, scoped, tag = 'scoped memory for tpu_custom_call.1']
    #allocation10 [shape = 'u8[16384]{0}', space=vmem, size = 0x4000, scoped, tag = 'input window, operand 6, single buffered']
    #allocation11 [shape = 'u8[16384]{0}', space=vmem, size = 0x4000, scoped, tag = 'input window, operand 8, single buffered']
    #allocation12 [shape = 's32[1]{0}', space=sflag, size = 0x4, scoped, tag = 'scoped memory for tpu_custom_call.1']
    #allocation13 [shape = 'u8[2048]{0}', space=vmem, size = 0x800, scoped, tag = 'output window, operand 0']
    %21 = vsyncpa [#allocation6], 0
    %22 = vsyncpa [#allocation9], 0
    %23 = vsyncpa [#allocation12], 0
    %24 = vsyncpa [#allocation7], 0
    %s25 = scalar_lea.sflag [#allocation7], 1
    %26 = vsyncpa %s25, 0
    loop: start=0, step=1, limit=4
    $region2: #{tpu_custom_call.1} parent=1 // loop_pre_header
      _
    $region3: #{tpu_custom_call.1} parent=1 // loop_header
      %s28 = sphi 0, %s32
      %p29 = scmp.ge.s32.totalorder %s28, 4
      %s38 = sphi 0, %s40
      %s41 = sphi 0, %s38
      %s42 = sphi 0, %s41
      %s58 = sphi 0, %s42
      %s62 = sphi 0, %s62
      %s64 = sphi 0, %s62
      %s65 = sphi 0, %s64
      %s79 = sphi 0, %s65
      %s83 = sphi 0, %s83
      %s85 = sphi 0, %s83
      %s86 = sphi 0, %s85
      %s100 = sphi 0, %s86
      %s104 = sphi 0, %s104
      %s106 = sphi 0, %s104
      %s107 = sphi 0, %s106
      %s121 = sphi 0, %s107
      %s125 = sphi 0, %s125
      %s127 = sphi 0, %s125
      %s128 = sphi 0, %s127
      %s142 = sphi 0, %s128
      %s146 = sphi 0, %s146
      %s148 = sphi 0, %s146
      %s149 = sphi 0, %s148
      %s163 = sphi 0, %s149
      %s167 = sphi 0, %s167
      %s169 = sphi 0, %s167
      %s170 = sphi 0, %s169
      %s184 = sphi 0, %s170
      %s188 = sphi 0, %s188
      %s190 = sphi 0, %s188
      %s191 = sphi 0, %s190
      %s205 = sphi 0, %s191
      %s209 = sphi 0, %s209
      %s211 = sphi 0, %s209
      %s212 = sphi 0, %s211
      %s226 = sphi 0, %s212
      %s232 = sphi 0, %s234
      %s235 = sphi 0, %s232
      %s236 = sphi 0, %s235
      %s252 = sphi 0, %s236
    $region4: #{tpu_custom_call.1} parent=1 // loop_header_branch
      %31 = sbr.rel (%p29) target = $region8
    $region5: #{tpu_custom_call.1} parent=1 // loop_body
      %s33 = ssub.s32 %s28, 1
      %s34 = ssub.s32 %s28, 2
      %s35 = sadd.s32 %s28, 1
      %s36 = ssub.s32 %s28, %s35
      %p37 = scmp.eq.s32.totalorder %s36, 0
      %s39 = sadd.s32 %s38, 1
      %s40 = scalar_select %p37, %s38, %s39
      %p43 = pneg %p37
      %p44 = scmp.eq.s32.totalorder %s28, 1
      %p45 = por %p43, %p44
      %p46 = scmp.ne.s32.totalorder %s38, %s41
      %p47 = scmp.eq.s32.totalorder %s28, 0
      %p48 = por %p46, %p47
      %p49 = scmp.ne.s32.totalorder %s38, %s41
      %p50 = scmp.eq.s32.totalorder %s33, 1
      %p51 = por %p49, %p50
      %p52 = scmp.ne.s32.totalorder %s41, %s42
      %p53 = scmp.eq.s32.totalorder %s33, 0
      %p54 = por %p52, %p53
      %p55 = scmp.ne.s32.totalorder %s41, %s42
      %p56 = scmp.eq.s32.totalorder %s34, 1
      %p57 = por %p55, %p56
      %p59 = scmp.ne.s32.totalorder %s42, %s58
      %p60 = scmp.eq.s32.totalorder %s34, 0
      %p61 = por %p59, %p60
      %s63 = sadd.s32 %s62, 1
      %p66 = scmp.eq.s32.totalorder %s28, 1
      %p67 = scmp.ne.s32.totalorder %s62, %s64
      %p68 = scmp.eq.s32.totalorder %s28, 0
      %p69 = por %p67, %p68
      %p70 = scmp.ne.s32.totalorder %s62, %s64
      %p71 = scmp.eq.s32.totalorder %s33, 1
      %p72 = por %p70, %p71
      %p73 = scmp.ne.s32.totalorder %s64, %s65
      %p74 = scmp.eq.s32.totalorder %s33, 0
      %p75 = por %p73, %p74
      %p76 = scmp.ne.s32.totalorder %s64, %s65
      %p77 = scmp.eq.s32.totalorder %s34, 1
      %p78 = por %p76, %p77
      %p80 = scmp.ne.s32.totalorder %s65, %s79
      %p81 = scmp.eq.s32.totalorder %s34, 0
      %p82 = por %p80, %p81
      %s84 = sadd.s32 %s83, 1
      %p87 = scmp.eq.s32.totalorder %s28, 1
      %p88 = scmp.ne.s32.totalorder %s83, %s85
      %p89 = scmp.eq.s32.totalorder %s28, 0
      %p90 = por %p88, %p89
      %p91 = scmp.ne.s32.totalorder %s83, %s85
      %p92 = scmp.eq.s32.totalorder %s33, 1
      %p93 = por %p91, %p92
      %p94 = scmp.ne.s32.totalorder %s85, %s86
      %p95 = scmp.eq.s32.totalorder %s33, 0
      %p96 = por %p94, %p95
      %p97 = scmp.ne.s32.totalorder %s85, %s86
      %p98 = scmp.eq.s32.totalorder %s34, 1
      %p99 = por %p97, %p98
      %p101 = scmp.ne.s32.totalorder %s86, %s100
      %p102 = scmp.eq.s32.totalorder %s34, 0
      %p103 = por %p101, %p102
      %s105 = sadd.s32 %s104, 1
      %p108 = scmp.eq.s32.totalorder %s28, 1
      %p109 = scmp.ne.s32.totalorder %s104, %s106
      %p110 = scmp.eq.s32.totalorder %s28, 0
      %p111 = por %p109, %p110
      %p112 = scmp.ne.s32.totalorder %s104, %s106
      %p113 = scmp.eq.s32.totalorder %s33, 1
      %p114 = por %p112, %p113
      %p115 = scmp.ne.s32.totalorder %s106, %s107
      %p116 = scmp.eq.s32.totalorder %s33, 0
      %p117 = por %p115, %p116
      %p118 = scmp.ne.s32.totalorder %s106, %s107
      %p119 = scmp.eq.s32.totalorder %s34, 1
      %p120 = por %p118, %p119
      %p122 = scmp.ne.s32.totalorder %s107, %s121
      %p123 = scmp.eq.s32.totalorder %s34, 0
      %p124 = por %p122, %p123
      %s126 = sadd.s32 %s125, 1
      %p129 = scmp.eq.s32.totalorder %s28, 1
      %p130 = scmp.ne.s32.totalorder %s125, %s127
      %p131 = scmp.eq.s32.totalorder %s28, 0
      %p132 = por %p130, %p131
      %p133 = scmp.ne.s32.totalorder %s125, %s127
      %p134 = scmp.eq.s32.totalorder %s33, 1
      %p135 = por %p133, %p134
      %p136 = scmp.ne.s32.totalorder %s127, %s128
      %p137 = scmp.eq.s32.totalorder %s33, 0
      %p138 = por %p136, %p137
      %p139 = scmp.ne.s32.totalorder %s127, %s128
      %p140 = scmp.eq.s32.totalorder %s34, 1
      %p141 = por %p139, %p140
      %p143 = scmp.ne.s32.totalorder %s128, %s142
      %p144 = scmp.eq.s32.totalorder %s34, 0
      %p145 = por %p143, %p144
      %s147 = sadd.s32 %s146, 1
      %p150 = scmp.eq.s32.totalorder %s28, 1
      %p151 = scmp.ne.s32.totalorder %s146, %s148
      %p152 = scmp.eq.s32.totalorder %s28, 0
      %p153 = por %p151, %p152
      %p154 = scmp.ne.s32.totalorder %s146, %s148
      %p155 = scmp.eq.s32.totalorder %s33, 1
      %p156 = por %p154, %p155
      %p157 = scmp.ne.s32.totalorder %s148, %s149
      %p158 = scmp.eq.s32.totalorder %s33, 0
      %p159 = por %p157, %p158
      %p160 = scmp.ne.s32.totalorder %s148, %s149
      %p161 = scmp.eq.s32.totalorder %s34, 1
      %p162 = por %p160, %p161
      %p164 = scmp.ne.s32.totalorder %s149, %s163
      %p165 = scmp.eq.s32.totalorder %s34, 0
      %p166 = por %p164, %p165
      %s168 = sadd.s32 %s167, 1
      %p171 = scmp.eq.s32.totalorder %s28, 1
      %p172 = scmp.ne.s32.totalorder %s167, %s169
      %p173 = scmp.eq.s32.totalorder %s28, 0
      %p174 = por %p172, %p173
      %p175 = scmp.ne.s32.totalorder %s167, %s169
      %p176 = scmp.eq.s32.totalorder %s33, 1
      %p177 = por %p175, %p176
      %p178 = scmp.ne.s32.totalorder %s169, %s170
      %p179 = scmp.eq.s32.totalorder %s33, 0
      %p180 = por %p178, %p179
      %p181 = scmp.ne.s32.totalorder %s169, %s170
      %p182 = scmp.eq.s32.totalorder %s34, 1
      %p183 = por %p181, %p182
      %p185 = scmp.ne.s32.totalorder %s170, %s184
      %p186 = scmp.eq.s32.totalorder %s34, 0
      %p187 = por %p185, %p186
      %s189 = sadd.s32 %s188, 1
      %p192 = scmp.eq.s32.totalorder %s28, 1
      %p193 = scmp.ne.s32.totalorder %s188, %s190
      %p194 = scmp.eq.s32.totalorder %s28, 0
      %p195 = por %p193, %p194
      %p196 = scmp.ne.s32.totalorder %s188, %s190
      %p197 = scmp.eq.s32.totalorder %s33, 1
      %p198 = por %p196, %p197
      %p199 = scmp.ne.s32.totalorder %s190, %s191
      %p200 = scmp.eq.s32.totalorder %s33, 0
      %p201 = por %p199, %p200
      %p202 = scmp.ne.s32.totalorder %s190, %s191
      %p203 = scmp.eq.s32.totalorder %s34, 1
      %p204 = por %p202, %p203
      %p206 = scmp.ne.s32.totalorder %s191, %s205
      %p207 = scmp.eq.s32.totalorder %s34, 0
      %p208 = por %p206, %p207
      %s210 = sadd.s32 %s209, 1
      %p213 = scmp.eq.s32.totalorder %s28, 1
      %p214 = scmp.ne.s32.totalorder %s209, %s211
      %p215 = scmp.eq.s32.totalorder %s28, 0
      %p216 = por %p214, %p215
      %p217 = scmp.ne.s32.totalorder %s209, %s211
      %p218 = scmp.eq.s32.totalorder %s33, 1
      %p219 = por %p217, %p218
      %p220 = scmp.ne.s32.totalorder %s211, %s212
      %p221 = scmp.eq.s32.totalorder %s33, 0
      %p222 = por %p220, %p221
      %p223 = scmp.ne.s32.totalorder %s211, %s212
      %p224 = scmp.eq.s32.totalorder %s34, 1
      %p225 = por %p223, %p224
      %p227 = scmp.ne.s32.totalorder %s212, %s226
      %p228 = scmp.eq.s32.totalorder %s34, 0
      %p229 = por %p227, %p228
      %s230 = ssub.s32 %s28, %s35
      %p231 = scmp.eq.s32.totalorder %s230, 0
      %s233 = sadd.s32 %s232, 1
      %s234 = scalar_select %p231, %s232, %s233
      %p237 = pneg %p231
      %p238 = scmp.eq.s32.totalorder %s28, 1
      %p239 = por %p237, %p238
      %p240 = scmp.ne.s32.totalorder %s232, %s235
      %p241 = scmp.eq.s32.totalorder %s28, 0
      %p242 = por %p240, %p241
      %p243 = scmp.ne.s32.totalorder %s232, %s235
      %p244 = scmp.eq.s32.totalorder %s33, 1
      %p245 = por %p243, %p244
      %p246 = scmp.ne.s32.totalorder %s235, %s236
      %p247 = scmp.eq.s32.totalorder %s33, 0
      %p248 = por %p246, %p247
      %p249 = scmp.ne.s32.totalorder %s235, %s236
      %p250 = scmp.eq.s32.totalorder %s34, 1
      %p251 = por %p249, %p250
      %p253 = scmp.ne.s32.totalorder %s236, %s252
      %p254 = scmp.eq.s32.totalorder %s34, 0
      %p255 = por %p253, %p254
      %p256 = scmp.le.s32.totalorder 1, %s28
      %p257 = scmp.lt.s32.totalorder %s28, 3
      %p258 = pnand %p256, %p257
      %p259 = pneg %p258
      // Predicated region
      $region9: #{tpu_custom_call.1} parent=5 // pred_check
        _
      $region10: #{tpu_custom_call.1} parent=5 // pred_check_branch
        %261 = sbr.rel (%p258) target = $region12
      $region11: #{tpu_custom_call.1} parent=5 // pred_region
        %s262 = ssub.s32 %s28, 1
        // Predicated region
        $region13: #{tpu_custom_call.1} parent=11 // pred_check
          %p263 = pneg %p75
        $region14: #{tpu_custom_call.1} parent=11 // pred_check_branch
          %265 = sbr.rel (%p263) target = $region16
        $region15: #{tpu_custom_call.1} parent=11 // pred_region
          %s267 = ssub.s32 640, 640
          %268 = vsyncadd [#allocation6], %s267
          %s269 = sshll.u32 [#allocation5], 4
          %s270 = int_to_ptr.vmem [resolvable:$true] %s269
          %275 = dma.hbm_to_vmem [thread:$0]  %s2, 640, %s270, [#allocation6], 128, 128, 8
        $region16: #{tpu_custom_call.1} parent=11 // pred_fallthru
          _
        // Predicated region
        $region17: #{tpu_custom_call.1} parent=11 // pred_check
          %p276 = pneg %p96
        $region18: #{tpu_custom_call.1} parent=11 // pred_check_branch
          %278 = sbr.rel (%p276) target = $region20
        $region19: #{tpu_custom_call.1} parent=11 // pred_region
          _
        $region20: #{tpu_custom_call.1} parent=11 // pred_fallthru
          _
        // Predicated region
        $region21: #{tpu_custom_call.1} parent=11 // pred_check
          %p279 = pneg %p117
        $region22: #{tpu_custom_call.1} parent=11 // pred_check_branch
          %281 = sbr.rel (%p279) target = $region24
        $region23: #{tpu_custom_call.1} parent=11 // pred_region
          _
        $region24: #{tpu_custom_call.1} parent=11 // pred_fallthru
          _
        // Predicated region
        $region25: #{tpu_custom_call.1} parent=11 // pred_check
          %p282 = pneg %p138
        $region26: #{tpu_custom_call.1} parent=11 // pred_check_branch
          %284 = sbr.rel (%p282) target = $region28
        $region27: #{tpu_custom_call.1} parent=11 // pred_region
          %s286 = ssub.s32 512, 512
          %287 = vsyncadd [#allocation9], %s286
          %s288 = sshll.u32 [#allocation8], 4
          %s289 = int_to_ptr.vmem [resolvable:$true] %s288
          %294 = dma.hbm_to_vmem [thread:$0]  %s5, 512, %s289, [#allocation9], 128, 128, 8
        $region28: #{tpu_custom_call.1} parent=11 // pred_fallthru
          _
        // Predicated region
        $region29: #{tpu_custom_call.1} parent=11 // pred_check
          %p295 = pneg %p159
        $region30: #{tpu_custom_call.1} parent=11 // pred_check_branch
          %297 = sbr.rel (%p295) target = $region32
        $region31: #{tpu_custom_call.1} parent=11 // pred_region
          %s299 = ssub.s32 512, 512
          %300 = vsyncadd [#allocation9], %s299
          %s301 = sshll.u32 [#allocation10], 4
          %s302 = int_to_ptr.vmem [resolvable:$true] %s301
          %307 = dma.hbm_to_vmem [thread:$0]  %s6, 512, %s302, [#allocation9], 128, 128, 8
        $region32: #{tpu_custom_call.1} parent=11 // pred_fallthru
          _
        // Predicated region
        $region33: #{tpu_custom_call.1} parent=11 // pred_check
          %p308 = pneg %p180
        $region34: #{tpu_custom_call.1} parent=11 // pred_check_branch
          %310 = sbr.rel (%p308) target = $region36
        $region35: #{tpu_custom_call.1} parent=11 // pred_region
          _
        $region36: #{tpu_custom_call.1} parent=11 // pred_fallthru
          _
        // Predicated region
        $region37: #{tpu_custom_call.1} parent=11 // pred_check
          %p311 = pneg %p201
        $region38: #{tpu_custom_call.1} parent=11 // pred_check_branch
          %313 = sbr.rel (%p311) target = $region40
        $region39: #{tpu_custom_call.1} parent=11 // pred_region
          %s315 = ssub.s32 512, 512
          %316 = vsyncadd [#allocation12], %s315
          %s317 = sshll.u32 [#allocation11], 4
          %s318 = int_to_ptr.vmem [resolvable:$true] %s317
          %323 = dma.hbm_to_vmem [thread:$0]  %s8, 512, %s318, [#allocation12], 128, 128, 8
        $region40: #{tpu_custom_call.1} parent=11 // pred_fallthru
          _
        // Predicated region
        $region41: #{tpu_custom_call.1} parent=11 // pred_check
          %p324 = pneg %p222
        $region42: #{tpu_custom_call.1} parent=11 // pred_check_branch
          %326 = sbr.rel (%p324) target = $region44
        $region43: #{tpu_custom_call.1} parent=11 // pred_region
          _
        $region44: #{tpu_custom_call.1} parent=11 // pred_fallthru
          _
      $region12: #{tpu_custom_call.1} parent=5 // pred_fallthru
        _
      %p327 = scmp.lt.s32.totalorder %s28, 2
      // Predicated region
      $region45: #{tpu_custom_call.1} parent=5 // pred_check
        %p328 = pneg %p327
      $region46: #{tpu_custom_call.1} parent=5 // pred_check_branch
        %330 = sbr.rel (%p328) target = $region48
      $region47: #{tpu_custom_call.1} parent=5 // pred_region
        // Predicated region
        $region49: #{tpu_custom_call.1} parent=47 // pred_check
          %p331 = pneg %p48
        $region50: #{tpu_custom_call.1} parent=47 // pred_check_branch
          %333 = sbr.rel (%p331) target = $region52
        $region51: #{tpu_custom_call.1} parent=47 // pred_region
          %p334 = scmp.lt.s32.totalorder %s28, 1
          %s335 = scalar_select %p334, %s28, 1
          %s336 = smul.addr %s335, 8
          %s337 = scalar_lea.vmem %s1, %s336
        $region52: #{tpu_custom_call.1} parent=47 // pred_fallthru
          _
      $region48: #{tpu_custom_call.1} parent=5 // pred_fallthru
        _
      %p338 = scmp.le.s32.totalorder 1, %s28
      %p339 = scmp.lt.s32.totalorder %s28, 3
      %p340 = pnand %p338, %p339
      %p341 = pneg %p340
      // Predicated region
      $region53: #{tpu_custom_call.1} parent=5 // pred_check
        _
      $region54: #{tpu_custom_call.1} parent=5 // pred_check_branch
        %343 = sbr.rel (%p340) target = $region56
      $region55: #{tpu_custom_call.1} parent=5 // pred_region
        %s344 = ssub.s32 %s28, 1
        // Predicated region
        $region57: #{tpu_custom_call.1} parent=55 // pred_check
          %p345 = pneg %p75
        $region58: #{tpu_custom_call.1} parent=55 // pred_check_branch
          %347 = sbr.rel (%p345) target = $region60
        $region59: #{tpu_custom_call.1} parent=55 // pred_region
          %348 = dma.done [#allocation6], 640
        $region60: #{tpu_custom_call.1} parent=55 // pred_fallthru
          _
        // Predicated region
        $region61: #{tpu_custom_call.1} parent=55 // pred_check
          %p349 = pneg %p138
        $region62: #{tpu_custom_call.1} parent=55 // pred_check_branch
          %351 = sbr.rel (%p349) target = $region64
        $region63: #{tpu_custom_call.1} parent=55 // pred_region
          %352 = dma.done [#allocation9], 512
        $region64: #{tpu_custom_call.1} parent=55 // pred_fallthru
          _
        // Predicated region
        $region65: #{tpu_custom_call.1} parent=55 // pred_check
          %p353 = pneg %p159
        $region66: #{tpu_custom_call.1} parent=55 // pred_check_branch
          %355 = sbr.rel (%p353) target = $region68
        $region67: #{tpu_custom_call.1} parent=55 // pred_region
          %356 = dma.done [#allocation9], 512
        $region68: #{tpu_custom_call.1} parent=55 // pred_fallthru
          _
        // Predicated region
        $region69: #{tpu_custom_call.1} parent=55 // pred_check
          %p357 = pneg %p201
        $region70: #{tpu_custom_call.1} parent=55 // pred_check_branch
          %359 = sbr.rel (%p357) target = $region72
        $region71: #{tpu_custom_call.1} parent=55 // pred_region
          %360 = dma.done [#allocation12], 512
        $region72: #{tpu_custom_call.1} parent=55 // pred_fallthru
          _
        %p361 = scmp.lt.s32.totalorder %s33, 1
        %s362 = scalar_select %p361, %s33, 1
        %s363 = smul.addr %s362, 8
        %s364 = scalar_lea.vmem %s1, %s363
        %p365 = pneg %p54
        %p366 = pneg %p51
        %p367 = pneg %p75
        %p368 = pneg %p72
        %p369 = pneg %p96
        %p370 = pneg %p93
        %p371 = pneg %p117
        %p372 = pneg %p114
        %p373 = pneg %p138
        %p374 = pneg %p135
        %p375 = pneg %p159
        %p376 = pneg %p156
        %p377 = pneg %p180
        %p378 = pneg %p177
        %p379 = pneg %p201
        %p380 = pneg %p198
        %p381 = pneg %p222
        %p382 = pneg %p219
        %p383 = pneg %p248
        %p384 = pneg %p245
        %s385 = sand.u32 %s235, 1
        %s386 = scalar_lea.sflag [#allocation7], %s385
        %s387 = sand.u32 %s235, 1
        %s388 = smul.addr %s387, 2
        %s389 = scalar_lea.vmem [#allocation13], %s388
        %p390 = scmp.lt.s32.totalorder %s33, 1
        %s391 = scalar_select %p390, %s33, 1
        %s392 = smul.addr %s391, 8
        %s393 = scalar_lea.vmem %s1, %s392
        %v394 = vld [vmem:[%s393] sm:$0x7f]
        %v395 = vld [vmem:[#allocation5] sm:$0xff]
        %v396 = vld [vmem:[#allocation5 + $0x8] sm:$0xff]
        %v397 = vld [vmem:[#allocation5 + $0x10] sm:$0xff]
        %v398 = vld [vmem:[#allocation5 + $0x18] sm:$0xff]
        %v399 = vld [vmem:[#allocation5 + $0x20] sm:$0x1]
        %v400 = vld [vmem:[%s4] sm:$0x1]
        %v402 = vlaneseq
        %v403 = vshrl.u32 %v402, 7
        %v404 = vsub.s32 0, %v403
        %v405 = vrot.slane %v400, %v404
        %vm407 = vcmask 269312
        %v409 = vsel %vm407, %v394, 0
        %vm411 = vcmask 1040384
        %v413 = vsel %vm411, %v399, 0
        %415 = vmatprep.subr.mxu0 0.0
        %416 = vmatpush1.msra.mxu0 %v395
        %417 = vmatprep.subr.mxu0 0.0
        %418 = vmatpush1.msra.mxu0 %v396
        %419 = vmatprep.subr.mxu0 0.0
        %420 = vmatpush1.msra.mxu0 %v397
        %421 = vmatprep.subr.mxu0 0.0
        %422 = vmatpush1.msra.mxu0 %v398
        %423 = vmatprep.subr.mxu0 0.0
        %424 = vmatpush1.msra.mxu0 %v413
        %425 = vmatprep.subr.mxu0 0.0
        %426 = vmatpush1.msra.mxu0 0.0
        %427 = vmatprep.subr.mxu0 0.0
        %428 = vmatpush1.msra.mxu0 0.0
        %429 = vmatprep.subr.mxu0 0.0
        %430 = vmatpush1.msra.mxu0 0.0
        %431 = vmatprep.subr.mxu0 0.0
        %432 = vmatpush1.msra.mxu0 0.0
        %433 = vmatprep.subr.mxu0 0.0
        %434 = vmatpush1.msra.mxu0 0.0
        %435 = vmatprep.subr.mxu0 0.0
        %436 = vmatpush1.msra.mxu0 0.0
        %437 = vmatprep.subr.mxu0 0.0
        %438 = vmatpush1.msra.mxu0 0.0
        %439 = vmatprep.subr.mxu0 0.0
        %440 = vmatpush1.msra.mxu0 0.0
        %441 = vmatprep.subr.mxu0 0.0
        %442 = vmatpush1.msra.mxu0 0.0
        %443 = vmatprep.subr.mxu0 0.0
        %444 = vmatpush1.msra.mxu0 0.0
        %445 = vmatprep.subr.mxu0 0.0
        %446 = vmatpush1.msra.mxu0 0.0
        %447 = vmatprep.subr.mxu0 0.0
        %448 = vmatpush1.msra.mxu0 0.0
        %449 = vmatprep.subr.mxu0 0.0
        %450 = vmatpush1.msra.mxu0 0.0
        %451 = vmatprep.subr.mxu0 0.0
        %452 = vmatpush1.msra.mxu0 0.0
        %453 = vmatprep.subr.mxu0 0.0
        %454 = vmatpush1.msra.mxu0 0.0
        %455 = vmatprep.subr.mxu0 0.0
        %456 = vmatpush1.msra.mxu0 0.0
        %457 = vmatprep.subr.mxu0 0.0
        %458 = vmatpush1.msra.mxu0 0.0
        %459 = vmatprep.subr.mxu0 0.0
        %460 = vmatpush1.msra.mxu0 0.0
        %461 = vmatprep.subr.mxu0 0.0
        %462 = vmatpush1.msra.mxu0 0.0
        %463 = vmatprep.subr.mxu0 0.0
        %464 = vmatpush1.msra.mxu0 0.0
        %465 = vmatprep.subr.mxu0 0.0
        %466 = vmatpush1.msra.mxu0 0.0
        %467 = vmatprep.subr.mxu0 0.0
        %468 = vmatpush1.msra.mxu0 0.0
        %469 = vmatprep.subr.mxu0 0.0
        %470 = vmatpush1.msra.mxu0 0.0
        %471 = vmatprep.subr.mxu0 0.0
        %472 = vmatpush1.msra.mxu0 0.0
        %473 = vmatprep.subr.mxu0 0.0
        %474 = vmatpush1.msra.mxu0 0.0
        %475 = vmatprep.subr.mxu0 0.0
        %476 = vmatpush1.msra.mxu0 0.0
        %477 = vmatprep.subr.mxu0 0.0
        %478 = vmatpush1.msra.mxu0 0.0
        %479 = vmatprep.mubr.f32.mxu0 0.0
        %480 = vmatmul.mubr.f32.gmra.mrb[0].mxu0 %v409
        %v481 = vpop.f32.mrb[0].mxu0
        %v482 = vadd.f32 %v405, %v481
        %v483 = vpop.f32.mrb[0].mxu0
        %484 = vdwg.mxu0
        %v485 = vld [vmem:[%s3] sm:$0xff]
        %v486 = vld [vmem:[%s3 + $0x8] sm:$0xff]
        %v487 = vld [vmem:[%s3 + $0x10] sm:$0xff]
        %v488 = vld [vmem:[%s3 + $0x18] sm:$0xff]
        %vm489 = vcmask 261120
        %v491 = vsel %vm489, 0.0, 0
        %493 = vmatprep.subr.mxu0 0.0
        %494 = vmatpush1.msra.mxu0 %v485
        %495 = vmatprep.subr.mxu0 0.0
        %496 = vmatpush1.msra.mxu0 %v486
        %497 = vmatprep.subr.mxu0 0.0
        %498 = vmatpush1.msra.mxu0 %v487
        %499 = vmatprep.subr.mxu0 0.0
        %500 = vmatpush1.msra.mxu0 %v488
        %501 = vmatprep.subr.mxu0 0.0
        %502 = vmatpush1.msra.mxu0 0.0
        %503 = vmatprep.subr.mxu0 0.0
        %504 = vmatpush1.msra.mxu0 0.0
        %505 = vmatprep.subr.mxu0 0.0
        %506 = vmatpush1.msra.mxu0 0.0
        %507 = vmatprep.subr.mxu0 0.0
        %508 = vmatpush1.msra.mxu0 0.0
        %509 = vmatprep.subr.mxu0 0.0
        %510 = vmatpush1.msra.mxu0 0.0
        %511 = vmatprep.subr.mxu0 0.0
        %512 = vmatpush1.msra.mxu0 0.0
        %513 = vmatprep.subr.mxu0 0.0
        %514 = vmatpush1.msra.mxu0 0.0
        %515 = vmatprep.subr.mxu0 0.0
        %516 = vmatpush1.msra.mxu0 0.0
        %517 = vmatprep.subr.mxu0 0.0
        %518 = vmatpush1.msra.mxu0 0.0
        %519 = vmatprep.subr.mxu0 0.0
        %520 = vmatpush1.msra.mxu0 0.0
        %521 = vmatprep.subr.mxu0 0.0
        %522 = vmatpush1.msra.mxu0 0.0
        %523 = vmatprep.subr.mxu0 0.0
        %524 = vmatpush1.msra.mxu0 0.0
        %525 = vmatprep.subr.mxu0 0.0
        %526 = vmatpush1.msra.mxu0 0.0
        %527 = vmatprep.subr.mxu0 0.0
        %528 = vmatpush1.msra.mxu0 0.0
        %529 = vmatprep.subr.mxu0 0.0
        %530 = vmatpush1.msra.mxu0 0.0
        %531 = vmatprep.subr.mxu0 0.0
        %532 = vmatpush1.msra.mxu0 0.0
        %533 = vmatprep.subr.mxu0 0.0
        %534 = vmatpush1.msra.mxu0 0.0
        %535 = vmatprep.subr.mxu0 0.0
        %536 = vmatpush1.msra.mxu0 0.0
        %537 = vmatprep.subr.mxu0 0.0
        %538 = vmatpush1.msra.mxu0 0.0
        %539 = vmatprep.subr.mxu0 0.0
        %540 = vmatpush1.msra.mxu0 0.0
        %541 = vmatprep.subr.mxu0 0.0
        %542 = vmatpush1.msra.mxu0 0.0
        %543 = vmatprep.subr.mxu0 0.0
        %544 = vmatpush1.msra.mxu0 0.0
        %545 = vmatprep.subr.mxu0 0.0
        %546 = vmatpush1.msra.mxu0 0.0
        %547 = vmatprep.subr.mxu0 0.0
        %548 = vmatpush1.msra.mxu0 0.0
        %549 = vmatprep.subr.mxu0 0.0
        %550 = vmatpush1.msra.mxu0 0.0
        %551 = vmatprep.subr.mxu0 0.0
        %552 = vmatpush1.msra.mxu0 0.0
        %553 = vmatprep.subr.mxu0 0.0
        %554 = vmatpush1.msra.mxu0 0.0
        %555 = vmatprep.subr.mxu0 0.0
        %556 = vmatpush1.msra.mxu0 0.0
        %557 = vmatprep.mubr.f32.mxu0 0.0
        %558 = vmatmul.mubr.f32.gmra.mrb[0].mxu0 %v491
        %v559 = vpop.f32.mrb[0].mxu0
        %v560 = vadd.f32 0.0, %v559
        %v561 = vpop.f32.mrb[0].mxu0
        %562 = vdwg.mxu0
        %v563 = vadd.f32 %v482, %v560
        %v564 = vxor.u32 %v563, 2147483648
        %v565 = vmul.f32 %v564, 1.442695
        %v566 = vpow.pop %v565
        %v567 = vadd.f32 %v566, 1.0
        %v568 = vrcp.pop %v567
        %v569 = vmul.f32 1.0, %v568
        %v570 = vmul.f32 %v569, 2.0
        %v571 = vsub.f32 %v570, 1.0
        %v572 = vmul.f32 %v569, 0.0
        %574 = vrot.lane.b32.xlu0 %v571, 32
        %v575 = vpop.permute.xlu0 %574
        %v577 = vmul.f32 %v569, %v575
        %579 = vrot.lane.b32.xlu0 %v577, 32
        %v580 = vpop.permute.xlu0 %579
        %v582 = vadd.f32 %v572, %v580
        %v583 = vtanh.pop %v582
        %585 = vrot.lane.b32.xlu0 %v583, 32
        %v586 = vpop.permute.xlu0 %585
        %v588 = vmul.f32 %v569, %v586
        %590 = vrot.lane.b32.xlu0 %v588, 64
        %v591 = vpop.permute.xlu0 %590
        %v592 = vsel %vm489, %v591, 0
        %594 = vmatprep.subr.mxu0 0.0
        %595 = vmatpush1.msra.mxu0 %v485
        %596 = vmatprep.subr.mxu0 0.0
        %597 = vmatpush1.msra.mxu0 %v486
        %598 = vmatprep.subr.mxu0 0.0
        %599 = vmatpush1.msra.mxu0 %v487
        %600 = vmatprep.subr.mxu0 0.0
        %601 = vmatpush1.msra.mxu0 %v488
        %602 = vmatprep.subr.mxu0 0.0
        %603 = vmatpush1.msra.mxu0 0.0
        %604 = vmatprep.subr.mxu0 0.0
        %605 = vmatpush1.msra.mxu0 0.0
        %606 = vmatprep.subr.mxu0 0.0
        %607 = vmatpush1.msra.mxu0 0.0
        %608 = vmatprep.subr.mxu0 0.0
        %609 = vmatpush1.msra.mxu0 0.0
        %610 = vmatprep.subr.mxu0 0.0
        %611 = vmatpush1.msra.mxu0 0.0
        %612 = vmatprep.subr.mxu0 0.0
        %613 = vmatpush1.msra.mxu0 0.0
        %614 = vmatprep.subr.mxu0 0.0
        %615 = vmatpush1.msra.mxu0 0.0
        %616 = vmatprep.subr.mxu0 0.0
        %617 = vmatpush1.msra.mxu0 0.0
        %618 = vmatprep.subr.mxu0 0.0
        %619 = vmatpush1.msra.mxu0 0.0
        %620 = vmatprep.subr.mxu0 0.0
        %621 = vmatpush1.msra.mxu0 0.0
        %622 = vmatprep.subr.mxu0 0.0
        %623 = vmatpush1.msra.mxu0 0.0
        %624 = vmatprep.subr.mxu0 0.0
        %625 = vmatpush1.msra.mxu0 0.0
        %626 = vmatprep.subr.mxu0 0.0
        %627 = vmatpush1.msra.mxu0 0.0
        %628 = vmatprep.subr.mxu0 0.0
        %629 = vmatpush1.msra.mxu0 0.0
        %630 = vmatprep.subr.mxu0 0.0
        %631 = vmatpush1.msra.mxu0 0.0
        %632 = vmatprep.subr.mxu0 0.0
        %633 = vmatpush1.msra.mxu0 0.0
        %634 = vmatprep.subr.mxu0 0.0
        %635 = vmatpush1.msra.mxu0 0.0
        %636 = vmatprep.subr.mxu0 0.0
        %637 = vmatpush1.msra.mxu0 0.0
        %638 = vmatprep.subr.mxu0 0.0
        %639 = vmatpush1.msra.mxu0 0.0
        %640 = vmatprep.subr.mxu0 0.0
        %641 = vmatpush1.msra.mxu0 0.0
        %642 = vmatprep.subr.mxu0 0.0
        %643 = vmatpush1.msra.mxu0 0.0
        %644 = vmatprep.subr.mxu0 0.0
        %645 = vmatpush1.msra.mxu0 0.0
        %646 = vmatprep.subr.mxu0 0.0
        %647 = vmatpush1.msra.mxu0 0.0
        %648 = vmatprep.subr.mxu0 0.0
        %649 = vmatpush1.msra.mxu0 0.0
        %650 = vmatprep.subr.mxu0 0.0
        %651 = vmatpush1.msra.mxu0 0.0
        %652 = vmatprep.subr.mxu0 0.0
        %653 = vmatpush1.msra.mxu0 0.0
        %654 = vmatprep.subr.mxu0 0.0
        %655 = vmatpush1.msra.mxu0 0.0
        %656 = vmatprep.subr.mxu0 0.0
        %657 = vmatpush1.msra.mxu0 0.0
        %658 = vmatprep.mubr.f32.mxu0 0.0
        %659 = vmatmul.mubr.f32.gmra.mrb[0].mxu0 %v592
        %v660 = vpop.f32.mrb[0].mxu0
        %v661 = vadd.f32 0.0, %v660
        %v662 = vpop.f32.mrb[0].mxu0
        %663 = vdwg.mxu0
        %v665 = vrot.slane %v661, 7
        %v667 = vadd.f32 %v482, %v665
        %v668 = vxor.u32 %v667, 2147483648
        %v669 = vmul.f32 %v668, 1.442695
        %v670 = vpow.pop %v669
        %v671 = vadd.f32 %v670, 1.0
        %v672 = vrcp.pop %v671
        %v673 = vmul.f32 1.0, %v672
        %v674 = vmul.f32 %v673, 2.0
        %v675 = vsub.f32 %v674, 1.0
        %v677 = vrot.slane %v582, 7
        %v679 = vmul.f32 %v673, %v677
        %681 = vrot.lane.b32.xlu0 %v675, 32
        %v682 = vpop.permute.xlu0 %681
        %v684 = vmul.f32 %v673, %v682
        %686 = vrot.lane.b32.xlu0 %v684, 32
        %v687 = vpop.permute.xlu0 %686
        %v689 = vadd.f32 %v679, %v687
        %v690 = vtanh.pop %v689
        %692 = vrot.lane.b32.xlu0 %v690, 32
        %v693 = vpop.permute.xlu0 %692
        %v695 = vmul.f32 %v673, %v693
        %v697 = vrot.slane %v695, 1
        %698 = vrot.lane.b32.xlu0 %v697, 64
        %v699 = vpop.permute.xlu0 %698
        %v700 = vsel %vm489, %v699, 0
        %702 = vmatprep.subr.mxu0 0.0
        %703 = vmatpush1.msra.mxu0 %v485
        %704 = vmatprep.subr.mxu0 0.0
        %705 = vmatpush1.msra.mxu0 %v486
        %706 = vmatprep.subr.mxu0 0.0
        %707 = vmatpush1.msra.mxu0 %v487
        %708 = vmatprep.subr.mxu0 0.0
        %709 = vmatpush1.msra.mxu0 %v488
        %710 = vmatprep.subr.mxu0 0.0
        %711 = vmatpush1.msra.mxu0 0.0
        %712 = vmatprep.subr.mxu0 0.0
        %713 = vmatpush1.msra.mxu0 0.0
        %714 = vmatprep.subr.mxu0 0.0
        %715 = vmatpush1.msra.mxu0 0.0
        %716 = vmatprep.subr.mxu0 0.0
        %717 = vmatpush1.msra.mxu0 0.0
        %718 = vmatprep.subr.mxu0 0.0
        %719 = vmatpush1.msra.mxu0 0.0
        %720 = vmatprep.subr.mxu0 0.0
        %721 = vmatpush1.msra.mxu0 0.0
        %722 = vmatprep.subr.mxu0 0.0
        %723 = vmatpush1.msra.mxu0 0.0
        %724 = vmatprep.subr.mxu0 0.0
        %725 = vmatpush1.msra.mxu0 0.0
        %726 = vmatprep.subr.mxu0 0.0
        %727 = vmatpush1.msra.mxu0 0.0
        %728 = vmatprep.subr.mxu0 0.0
        %729 = vmatpush1.msra.mxu0 0.0
        %730 = vmatprep.subr.mxu0 0.0
        %731 = vmatpush1.msra.mxu0 0.0
        %732 = vmatprep.subr.mxu0 0.0
        %733 = vmatpush1.msra.mxu0 0.0
        %734 = vmatprep.subr.mxu0 0.0
        %735 = vmatpush1.msra.mxu0 0.0
        %736 = vmatprep.subr.mxu0 0.0
        %737 = vmatpush1.msra.mxu0 0.0
        %738 = vmatprep.subr.mxu0 0.0
        %739 = vmatpush1.msra.mxu0 0.0
        %740 = vmatprep.subr.mxu0 0.0
        %741 = vmatpush1.msra.mxu0 0.0
        %742 = vmatprep.subr.mxu0 0.0
        %743 = vmatpush1.msra.mxu0 0.0
        %744 = vmatprep.subr.mxu0 0.0
        %745 = vmatpush1.msra.mxu0 0.0
        %746 = vmatprep.subr.mxu0 0.0
        %747 = vmatpush1.msra.mxu0 0.0
        %748 = vmatprep.subr.mxu0 0.0
        %749 = vmatpush1.msra.mxu0 0.0
        %750 = vmatprep.subr.mxu0 0.0
        %751 = vmatpush1.msra.mxu0 0.0
        %752 = vmatprep.subr.mxu0 0.0
        %753 = vmatpush1.msra.mxu0 0.0
        %754 = vmatprep.subr.mxu0 0.0
        %755 = vmatpush1.msra.mxu0 0.0
        %756 = vmatprep.subr.mxu0 0.0
        %757 = vmatpush1.msra.mxu0 0.0
        %758 = vmatprep.subr.mxu0 0.0
        %759 = vmatpush1.msra.mxu0 0.0
        %760 = vmatprep.subr.mxu0 0.0
        %761 = vmatpush1.msra.mxu0 0.0
        %762 = vmatprep.subr.mxu0 0.0
        %763 = vmatpush1.msra.mxu0 0.0
        %764 = vmatprep.subr.mxu0 0.0
        %765 = vmatpush1.msra.mxu0 0.0
        %766 = vmatprep.mubr.f32.mxu0 0.0
        %767 = vmatmul.mubr.f32.gmra.mrb[0].mxu0 %v700
        %v768 = vpop.f32.mrb[0].mxu0
        %v769 = vadd.f32 0.0, %v768
        %v770 = vpop.f32.mrb[0].mxu0
        %771 = vdwg.mxu0
        %v773 = vrot.slane %v769, 6
        %v775 = vadd.f32 %v482, %v773
        %v776 = vxor.u32 %v775, 2147483648
        %v777 = vmul.f32 %v776, 1.442695
        %v778 = vpow.pop %v777
        %v779 = vadd.f32 %v778, 1.0
        %v780 = vrcp.pop %v779
        %v781 = vmul.f32 1.0, %v780
        %v782 = vmul.f32 %v781, 2.0
        %v783 = vsub.f32 %v782, 1.0
        %v785 = vrot.slane %v689, 7
        %v787 = vmul.f32 %v781, %v785
        %789 = vrot.lane.b32.xlu0 %v783, 32
        %v790 = vpop.permute.xlu0 %789
        %v792 = vmul.f32 %v781, %v790
        %794 = vrot.lane.b32.xlu0 %v792, 32
        %v795 = vpop.permute.xlu0 %794
        %v797 = vadd.f32 %v787, %v795
        %v798 = vtanh.pop %v797
        %800 = vrot.lane.b32.xlu0 %v798, 32
        %v801 = vpop.permute.xlu0 %800
        %v803 = vmul.f32 %v781, %v801
        %v805 = vrot.slane %v803, 2
        %806 = vrot.lane.b32.xlu0 %v805, 64
        %v807 = vpop.permute.xlu0 %806
        %v808 = vsel %vm489, %v807, 0
        %810 = vmatprep.subr.mxu0 0.0
        %811 = vmatpush1.msra.mxu0 %v485
        %812 = vmatprep.subr.mxu0 0.0
        %813 = vmatpush1.msra.mxu0 %v486
        %814 = vmatprep.subr.mxu0 0.0
        %815 = vmatpush1.msra.mxu0 %v487
        %816 = vmatprep.subr.mxu0 0.0
        %817 = vmatpush1.msra.mxu0 %v488
        %818 = vmatprep.subr.mxu0 0.0
        %819 = vmatpush1.msra.mxu0 0.0
        %820 = vmatprep.subr.mxu0 0.0
        %821 = vmatpush1.msra.mxu0 0.0
        %822 = vmatprep.subr.mxu0 0.0
        %823 = vmatpush1.msra.mxu0 0.0
        %824 = vmatprep.subr.mxu0 0.0
        %825 = vmatpush1.msra.mxu0 0.0
        %826 = vmatprep.subr.mxu0 0.0
        %827 = vmatpush1.msra.mxu0 0.0
        %828 = vmatprep.subr.mxu0 0.0
        %829 = vmatpush1.msra.mxu0 0.0
        %830 = vmatprep.subr.mxu0 0.0
        %831 = vmatpush1.msra.mxu0 0.0
        %832 = vmatprep.subr.mxu0 0.0
        %833 = vmatpush1.msra.mxu0 0.0
        %834 = vmatprep.subr.mxu0 0.0
        %835 = vmatpush1.msra.mxu0 0.0
        %836 = vmatprep.subr.mxu0 0.0
        %837 = vmatpush1.msra.mxu0 0.0
        %838 = vmatprep.subr.mxu0 0.0
        %839 = vmatpush1.msra.mxu0 0.0
        %840 = vmatprep.subr.mxu0 0.0
        %841 = vmatpush1.msra.mxu0 0.0
        %842 = vmatprep.subr.mxu0 0.0
        %843 = vmatpush1.msra.mxu0 0.0
        %844 = vmatprep.subr.mxu0 0.0
        %845 = vmatpush1.msra.mxu0 0.0
        %846 = vmatprep.subr.mxu0 0.0
        %847 = vmatpush1.msra.mxu0 0.0
        %848 = vmatprep.subr.mxu0 0.0
        %849 = vmatpush1.msra.mxu0 0.0
        %850 = vmatprep.subr.mxu0 0.0
        %851 = vmatpush1.msra.mxu0 0.0
        %852 = vmatprep.subr.mxu0 0.0
        %853 = vmatpush1.msra.mxu0 0.0
        %854 = vmatprep.subr.mxu0 0.0
        %855 = vmatpush1.msra.mxu0 0.0
        %856 = vmatprep.subr.mxu0 0.0
        %857 = vmatpush1.msra.mxu0 0.0
        %858 = vmatprep.subr.mxu0 0.0
        %859 = vmatpush1.msra.mxu0 0.0
        %860 = vmatprep.subr.mxu0 0.0
        %861 = vmatpush1.msra.mxu0 0.0
        %862 = vmatprep.subr.mxu0 0.0
        %863 = vmatpush1.msra.mxu0 0.0
        %864 = vmatprep.subr.mxu0 0.0
        %865 = vmatpush1.msra.mxu0 0.0
        %866 = vmatprep.subr.mxu0 0.0
        %867 = vmatpush1.msra.mxu0 0.0
        %868 = vmatprep.subr.mxu0 0.0
        %869 = vmatpush1.msra.mxu0 0.0
        %870 = vmatprep.subr.mxu0 0.0
        %871 = vmatpush1.msra.mxu0 0.0
        %872 = vmatprep.subr.mxu0 0.0
        %873 = vmatpush1.msra.mxu0 0.0
        %874 = vmatprep.mubr.f32.mxu0 0.0
        %875 = vmatmul.mubr.f32.gmra.mrb[0].mxu0 %v808
        %v876 = vpop.f32.mrb[0].mxu0
        %v877 = vadd.f32 0.0, %v876
        %v878 = vpop.f32.mrb[0].mxu0
        %879 = vdwg.mxu0
        %v881 = vrot.slane %v877, 5
        %v883 = vadd.f32 %v482, %v881
        %v884 = vxor.u32 %v883, 2147483648
        %v885 = vmul.f32 %v884, 1.442695
        %v886 = vpow.pop %v885
        %v887 = vadd.f32 %v886, 1.0
        %v888 = vrcp.pop %v887
        %v889 = vmul.f32 1.0, %v888
        %v890 = vmul.f32 %v889, 2.0
        %v891 = vsub.f32 %v890, 1.0
        %v893 = vrot.slane %v797, 7
        %v895 = vmul.f32 %v889, %v893
        %897 = vrot.lane.b32.xlu0 %v891, 32
        %v898 = vpop.permute.xlu0 %897
        %v900 = vmul.f32 %v889, %v898
        %902 = vrot.lane.b32.xlu0 %v900, 32
        %v903 = vpop.permute.xlu0 %902
        %v905 = vadd.f32 %v895, %v903
        %v906 = vtanh.pop %v905
        %908 = vrot.lane.b32.xlu0 %v906, 32
        %v909 = vpop.permute.xlu0 %908
        %v911 = vmul.f32 %v889, %v909
        %v913 = vrot.slane %v911, 3
        %914 = vrot.lane.b32.xlu0 %v913, 64
        %v915 = vpop.permute.xlu0 %914
        %v916 = vsel %vm489, %v915, 0
        %918 = vmatprep.subr.mxu0 0.0
        %919 = vmatpush1.msra.mxu0 %v485
        %920 = vmatprep.subr.mxu0 0.0
        %921 = vmatpush1.msra.mxu0 %v486
        %922 = vmatprep.subr.mxu0 0.0
        %923 = vmatpush1.msra.mxu0 %v487
        %924 = vmatprep.subr.mxu0 0.0
        %925 = vmatpush1.msra.mxu0 %v488
        %926 = vmatprep.subr.mxu0 0.0
        %927 = vmatpush1.msra.mxu0 0.0
        %928 = vmatprep.subr.mxu0 0.0
        %929 = vmatpush1.msra.mxu0 0.0
        %930 = vmatprep.subr.mxu0 0.0
        %931 = vmatpush1.msra.mxu0 0.0
        %932 = vmatprep.subr.mxu0 0.0
        %933 = vmatpush1.msra.mxu0 0.0
        %934 = vmatprep.subr.mxu0 0.0
        %935 = vmatpush1.msra.mxu0 0.0
        %936 = vmatprep.subr.mxu0 0.0
        %937 = vmatpush1.msra.mxu0 0.0
        %938 = vmatprep.subr.mxu0 0.0
        %939 = vmatpush1.msra.mxu0 0.0
        %940 = vmatprep.subr.mxu0 0.0
        %941 = vmatpush1.msra.mxu0 0.0
        %942 = vmatprep.subr.mxu0 0.0
        %943 = vmatpush1.msra.mxu0 0.0
        %944 = vmatprep.subr.mxu0 0.0
        %945 = vmatpush1.msra.mxu0 0.0
        %946 = vmatprep.subr.mxu0 0.0
        %947 = vmatpush1.msra.mxu0 0.0
        %948 = vmatprep.subr.mxu0 0.0
        %949 = vmatpush1.msra.mxu0 0.0
        %950 = vmatprep.subr.mxu0 0.0
        %951 = vmatpush1.msra.mxu0 0.0
        %952 = vmatprep.subr.mxu0 0.0
        %953 = vmatpush1.msra.mxu0 0.0
        %954 = vmatprep.subr.mxu0 0.0
        %955 = vmatpush1.msra.mxu0 0.0
        %956 = vmatprep.subr.mxu0 0.0
        %957 = vmatpush1.msra.mxu0 0.0
        %958 = vmatprep.subr.mxu0 0.0
        %959 = vmatpush1.msra.mxu0 0.0
        %960 = vmatprep.subr.mxu0 0.0
        %961 = vmatpush1.msra.mxu0 0.0
        %962 = vmatprep.subr.mxu0 0.0
        %963 = vmatpush1.msra.mxu0 0.0
        %964 = vmatprep.subr.mxu0 0.0
        %965 = vmatpush1.msra.mxu0 0.0
        %966 = vmatprep.subr.mxu0 0.0
        %967 = vmatpush1.msra.mxu0 0.0
        %968 = vmatprep.subr.mxu0 0.0
        %969 = vmatpush1.msra.mxu0 0.0
        %970 = vmatprep.subr.mxu0 0.0
        %971 = vmatpush1.msra.mxu0 0.0
        %972 = vmatprep.subr.mxu0 0.0
        %973 = vmatpush1.msra.mxu0 0.0
        %974 = vmatprep.subr.mxu0 0.0
        %975 = vmatpush1.msra.mxu0 0.0
        %976 = vmatprep.subr.mxu0 0.0
        %977 = vmatpush1.msra.mxu0 0.0
        %978 = vmatprep.subr.mxu0 0.0
        %979 = vmatpush1.msra.mxu0 0.0
        %980 = vmatprep.subr.mxu0 0.0
        %981 = vmatpush1.msra.mxu0 0.0
        %982 = vmatprep.mubr.f32.mxu0 0.0
        %983 = vmatmul.mubr.f32.gmra.mrb[0].mxu0 %v916
        %v984 = vpop.f32.mrb[0].mxu0
        %v985 = vadd.f32 0.0, %v984
        %v986 = vpop.f32.mrb[0].mxu0
        %987 = vdwg.mxu0
        %v989 = vrot.slane %v985, 4
        %v991 = vadd.f32 %v482, %v989
        %v992 = vxor.u32 %v991, 2147483648
        %v993 = vmul.f32 %v992, 1.442695
        %v994 = vpow.pop %v993
        %v995 = vadd.f32 %v994, 1.0
        %v996 = vrcp.pop %v995
        %v997 = vmul.f32 1.0, %v996
        %v998 = vmul.f32 %v997, 2.0
        %v999 = vsub.f32 %v998, 1.0
        %v1001 = vrot.slane %v905, 7
        %v1003 = vmul.f32 %v997, %v1001
        %1005 = vrot.lane.b32.xlu0 %v999, 32
        %v1006 = vpop.permute.xlu0 %1005
        %v1008 = vmul.f32 %v997, %v1006
        %1010 = vrot.lane.b32.xlu0 %v1008, 32
        %v1011 = vpop.permute.xlu0 %1010
        %v1013 = vadd.f32 %v1003, %v1011
        %v1014 = vtanh.pop %v1013
        %1016 = vrot.lane.b32.xlu0 %v1014, 32
        %v1017 = vpop.permute.xlu0 %1016
        %v1019 = vmul.f32 %v997, %v1017
        %v1021 = vrot.slane %v1019, 4
        %1022 = vrot.lane.b32.xlu0 %v1021, 64
        %v1023 = vpop.permute.xlu0 %1022
        %v1024 = vsel %vm489, %v1023, 0
        %1026 = vmatprep.subr.mxu0 0.0
        %1027 = vmatpush1.msra.mxu0 %v485
        %1028 = vmatprep.subr.mxu0 0.0
        %1029 = vmatpush1.msra.mxu0 %v486
        %1030 = vmatprep.subr.mxu0 0.0
        %1031 = vmatpush1.msra.mxu0 %v487
        %1032 = vmatprep.subr.mxu0 0.0
        %1033 = vmatpush1.msra.mxu0 %v488
        %1034 = vmatprep.subr.mxu0 0.0
        %1035 = vmatpush1.msra.mxu0 0.0
        %1036 = vmatprep.subr.mxu0 0.0
        %1037 = vmatpush1.msra.mxu0 0.0
        %1038 = vmatprep.subr.mxu0 0.0
        %1039 = vmatpush1.msra.mxu0 0.0
        %1040 = vmatprep.subr.mxu0 0.0
        %1041 = vmatpush1.msra.mxu0 0.0
        %1042 = vmatprep.subr.mxu0 0.0
        %1043 = vmatpush1.msra.mxu0 0.0
        %1044 = vmatprep.subr.mxu0 0.0
        %1045 = vmatpush1.msra.mxu0 0.0
        %1046 = vmatprep.subr.mxu0 0.0
        %1047 = vmatpush1.msra.mxu0 0.0
        %1048 = vmatprep.subr.mxu0 0.0
        %1049 = vmatpush1.msra.mxu0 0.0
        %1050 = vmatprep.subr.mxu0 0.0
        %1051 = vmatpush1.msra.mxu0 0.0
        %1052 = vmatprep.subr.mxu0 0.0
        %1053 = vmatpush1.msra.mxu0 0.0
        %1054 = vmatprep.subr.mxu0 0.0
        %1055 = vmatpush1.msra.mxu0 0.0
        %1056 = vmatprep.subr.mxu0 0.0
        %1057 = vmatpush1.msra.mxu0 0.0
        %1058 = vmatprep.subr.mxu0 0.0
        %1059 = vmatpush1.msra.mxu0 0.0
        %1060 = vmatprep.subr.mxu0 0.0
        %1061 = vmatpush1.msra.mxu0 0.0
        %1062 = vmatprep.subr.mxu0 0.0
        %1063 = vmatpush1.msra.mxu0 0.0
        %1064 = vmatprep.subr.mxu0 0.0
        %1065 = vmatpush1.msra.mxu0 0.0
        %1066 = vmatprep.subr.mxu0 0.0
        %1067 = vmatpush1.msra.mxu0 0.0
        %1068 = vmatprep.subr.mxu0 0.0
        %1069 = vmatpush1.msra.mxu0 0.0
        %1070 = vmatprep.subr.mxu0 0.0
        %1071 = vmatpush1.msra.mxu0 0.0
        %1072 = vmatprep.subr.mxu0 0.0
        %1073 = vmatpush1.msra.mxu0 0.0
        %1074 = vmatprep.subr.mxu0 0.0
        %1075 = vmatpush1.msra.mxu0 0.0
        %1076 = vmatprep.subr.mxu0 0.0
        %1077 = vmatpush1.msra.mxu0 0.0
        %1078 = vmatprep.subr.mxu0 0.0
        %1079 = vmatpush1.msra.mxu0 0.0
        %1080 = vmatprep.subr.mxu0 0.0
        %1081 = vmatpush1.msra.mxu0 0.0
        %1082 = vmatprep.subr.mxu0 0.0
        %1083 = vmatpush1.msra.mxu0 0.0
        %1084 = vmatprep.subr.mxu0 0.0
        %1085 = vmatpush1.msra.mxu0 0.0
        %1086 = vmatprep.subr.mxu0 0.0
        %1087 = vmatpush1.msra.mxu0 0.0
        %1088 = vmatprep.subr.mxu0 0.0
        %1089 = vmatpush1.msra.mxu0 0.0
        %1090 = vmatprep.mubr.f32.mxu0 0.0
        %1091 = vmatmul.mubr.f32.gmra.mrb[0].mxu0 %v1024
        %v1092 = vpop.f32.mrb[0].mxu0
        %v1093 = vadd.f32 0.0, %v1092
        %v1094 = vpop.f32.mrb[0].mxu0
        %1095 = vdwg.mxu0
        %v1097 = vrot.slane %v1093, 3
        %v1099 = vadd.f32 %v482, %v1097
        %v1100 = vxor.u32 %v1099, 2147483648
        %v1101 = vmul.f32 %v1100, 1.442695
        %v1102 = vpow.pop %v1101
        %v1103 = vadd.f32 %v1102, 1.0
        %v1104 = vrcp.pop %v1103
        %v1105 = vmul.f32 1.0, %v1104
        %v1106 = vmul.f32 %v1105, 2.0
        %v1107 = vsub.f32 %v1106, 1.0
        %v1109 = vrot.slane %v1013, 7
        %v1111 = vmul.f32 %v1105, %v1109
        %1113 = vrot.lane.b32.xlu0 %v1107, 32
        %v1114 = vpop.permute.xlu0 %1113
        %v1116 = vmul.f32 %v1105, %v1114
        %1118 = vrot.lane.b32.xlu0 %v1116, 32
        %v1119 = vpop.permute.xlu0 %1118
        %v1121 = vadd.f32 %v1111, %v1119
        %v1122 = vtanh.pop %v1121
        %1124 = vrot.lane.b32.xlu0 %v1122, 32
        %v1125 = vpop.permute.xlu0 %1124
        %v1127 = vmul.f32 %v1105, %v1125
        %v1129 = vrot.slane %v1127, 5
        %1130 = vrot.lane.b32.xlu0 %v1129, 64
        %v1131 = vpop.permute.xlu0 %1130
        %v1132 = vsel %vm489, %v1131, 0
        %1134 = vmatprep.subr.mxu0 0.0
        %1135 = vmatpush1.msra.mxu0 %v485
        %1136 = vmatprep.subr.mxu0 0.0
        %1137 = vmatpush1.msra.mxu0 %v486
        %1138 = vmatprep.subr.mxu0 0.0
        %1139 = vmatpush1.msra.mxu0 %v487
        %1140 = vmatprep.subr.mxu0 0.0
        %1141 = vmatpush1.msra.mxu0 %v488
        %1142 = vmatprep.subr.mxu0 0.0
        %1143 = vmatpush1.msra.mxu0 0.0
        %1144 = vmatprep.subr.mxu0 0.0
        %1145 = vmatpush1.msra.mxu0 0.0
        %1146 = vmatprep.subr.mxu0 0.0
        %1147 = vmatpush1.msra.mxu0 0.0
        %1148 = vmatprep.subr.mxu0 0.0
        %1149 = vmatpush1.msra.mxu0 0.0
        %1150 = vmatprep.subr.mxu0 0.0
        %1151 = vmatpush1.msra.mxu0 0.0
        %1152 = vmatprep.subr.mxu0 0.0
        %1153 = vmatpush1.msra.mxu0 0.0
        %1154 = vmatprep.subr.mxu0 0.0
        %1155 = vmatpush1.msra.mxu0 0.0
        %1156 = vmatprep.subr.mxu0 0.0
        %1157 = vmatpush1.msra.mxu0 0.0
        %1158 = vmatprep.subr.mxu0 0.0
        %1159 = vmatpush1.msra.mxu0 0.0
        %1160 = vmatprep.subr.mxu0 0.0
        %1161 = vmatpush1.msra.mxu0 0.0
        %1162 = vmatprep.subr.mxu0 0.0
        %1163 = vmatpush1.msra.mxu0 0.0
        %1164 = vmatprep.subr.mxu0 0.0
        %1165 = vmatpush1.msra.mxu0 0.0
        %1166 = vmatprep.subr.mxu0 0.0
        %1167 = vmatpush1.msra.mxu0 0.0
        %1168 = vmatprep.subr.mxu0 0.0
        %1169 = vmatpush1.msra.mxu0 0.0
        %1170 = vmatprep.subr.mxu0 0.0
        %1171 = vmatpush1.msra.mxu0 0.0
        %1172 = vmatprep.subr.mxu0 0.0
        %1173 = vmatpush1.msra.mxu0 0.0
        %1174 = vmatprep.subr.mxu0 0.0
        %1175 = vmatpush1.msra.mxu0 0.0
        %1176 = vmatprep.subr.mxu0 0.0
        %1177 = vmatpush1.msra.mxu0 0.0
        %1178 = vmatprep.subr.mxu0 0.0
        %1179 = vmatpush1.msra.mxu0 0.0
        %1180 = vmatprep.subr.mxu0 0.0
        %1181 = vmatpush1.msra.mxu0 0.0
        %1182 = vmatprep.subr.mxu0 0.0
        %1183 = vmatpush1.msra.mxu0 0.0
        %1184 = vmatprep.subr.mxu0 0.0
        %1185 = vmatpush1.msra.mxu0 0.0
        %1186 = vmatprep.subr.mxu0 0.0
        %1187 = vmatpush1.msra.mxu0 0.0
        %1188 = vmatprep.subr.mxu0 0.0
        %1189 = vmatpush1.msra.mxu0 0.0
        %1190 = vmatprep.subr.mxu0 0.0
        %1191 = vmatpush1.msra.mxu0 0.0
        %1192 = vmatprep.subr.mxu0 0.0
        %1193 = vmatpush1.msra.mxu0 0.0
        %1194 = vmatprep.subr.mxu0 0.0
        %1195 = vmatpush1.msra.mxu0 0.0
        %1196 = vmatprep.subr.mxu0 0.0
        %1197 = vmatpush1.msra.mxu0 0.0
        %1198 = vmatprep.mubr.f32.mxu0 0.0
        %1199 = vmatmul.mubr.f32.gmra.mrb[0].mxu0 %v1132
        %v1200 = vpop.f32.mrb[0].mxu0
        %v1201 = vadd.f32 0.0, %v1200
        %v1202 = vpop.f32.mrb[0].mxu0
        %1203 = vdwg.mxu0
        %v1205 = vrot.slane %v1201, 2
        %v1207 = vadd.f32 %v482, %v1205
        %v1208 = vxor.u32 %v1207, 2147483648
        %v1209 = vmul.f32 %v1208, 1.442695
        %v1210 = vpow.pop %v1209
        %v1211 = vadd.f32 %v1210, 1.0
        %v1212 = vrcp.pop %v1211
        %v1213 = vmul.f32 1.0, %v1212
        %v1214 = vmul.f32 %v1213, 2.0
        %v1215 = vsub.f32 %v1214, 1.0
        %v1217 = vrot.slane %v1121, 7
        %v1219 = vmul.f32 %v1213, %v1217
        %1221 = vrot.lane.b32.xlu0 %v1215, 32
        %v1222 = vpop.permute.xlu0 %1221
        %v1224 = vmul.f32 %v1213, %v1222
        %1226 = vrot.lane.b32.xlu0 %v1224, 32
        %v1227 = vpop.permute.xlu0 %1226
        %v1229 = vadd.f32 %v1219, %v1227
        %v1230 = vtanh.pop %v1229
        %1232 = vrot.lane.b32.xlu0 %v1230, 32
        %v1233 = vpop.permute.xlu0 %1232
        %v1235 = vmul.f32 %v1213, %v1233
        %v1236 = vsel %vm411, %v588, %v695
        %vm1237 = vcmask 1041408
        %v1238 = vsel %vm1237, %v1236, %v803
        %vm1239 = vcmask 1042432
        %v1240 = vsel %vm1239, %v1238, %v911
        %vm1241 = vcmask 1043456
        %v1242 = vsel %vm1241, %v1240, %v1019
        %vm1243 = vcmask 1044480
        %v1244 = vsel %vm1243, %v1242, %v1127
        %vm1245 = vcmask 1045504
        %v1246 = vsel %vm1245, %v1244, %v1235
        %v1247 = vld [vmem:[#allocation8] sm:$0xff]
        %v1248 = vld [vmem:[#allocation8 + $0x8] sm:$0xff]
        %v1249 = vld [vmem:[#allocation8 + $0x10] sm:$0xff]
        %v1250 = vld [vmem:[#allocation8 + $0x18] sm:$0xff]
        %v1251 = vld [vmem:[%s7] sm:$0x1]
        %v1253 = vlaneseq
        %v1254 = vshrl.u32 %v1253, 7
        %v1255 = vsub.s32 0, %v1254
        %v1256 = vrot.slane %v1251, %v1255
        %1259 = vrot.lane.b32.xlu0 %v1246, 64
        %v1260 = vpop.permute.xlu0 %1259
        %v1261 = vsel %vm489, %v1260, 0
        %1263 = vmatprep.subr.mxu0 0.0
        %1264 = vmatpush1.msra.mxu0 %v1247
        %1265 = vmatprep.subr.mxu0 0.0
        %1266 = vmatpush1.msra.mxu0 %v1248
        %1267 = vmatprep.subr.mxu0 0.0
        %1268 = vmatpush1.msra.mxu0 %v1249
        %1269 = vmatprep.subr.mxu0 0.0
        %1270 = vmatpush1.msra.mxu0 %v1250
        %1271 = vmatprep.subr.mxu0 0.0
        %1272 = vmatpush1.msra.mxu0 0.0
        %1273 = vmatprep.subr.mxu0 0.0
        %1274 = vmatpush1.msra.mxu0 0.0
        %1275 = vmatprep.subr.mxu0 0.0
        %1276 = vmatpush1.msra.mxu0 0.0
        %1277 = vmatprep.subr.mxu0 0.0
        %1278 = vmatpush1.msra.mxu0 0.0
        %1279 = vmatprep.subr.mxu0 0.0
        %1280 = vmatpush1.msra.mxu0 0.0
        %1281 = vmatprep.subr.mxu0 0.0
        %1282 = vmatpush1.msra.mxu0 0.0
        %1283 = vmatprep.subr.mxu0 0.0
        %1284 = vmatpush1.msra.mxu0 0.0
        %1285 = vmatprep.subr.mxu0 0.0
        %1286 = vmatpush1.msra.mxu0 0.0
        %1287 = vmatprep.subr.mxu0 0.0
        %1288 = vmatpush1.msra.mxu0 0.0
        %1289 = vmatprep.subr.mxu0 0.0
        %1290 = vmatpush1.msra.mxu0 0.0
        %1291 = vmatprep.subr.mxu0 0.0
        %1292 = vmatpush1.msra.mxu0 0.0
        %1293 = vmatprep.subr.mxu0 0.0
        %1294 = vmatpush1.msra.mxu0 0.0
        %1295 = vmatprep.subr.mxu0 0.0
        %1296 = vmatpush1.msra.mxu0 0.0
        %1297 = vmatprep.subr.mxu0 0.0
        %1298 = vmatpush1.msra.mxu0 0.0
        %1299 = vmatprep.subr.mxu0 0.0
        %1300 = vmatpush1.msra.mxu0 0.0
        %1301 = vmatprep.subr.mxu0 0.0
        %1302 = vmatpush1.msra.mxu0 0.0
        %1303 = vmatprep.subr.mxu0 0.0
        %1304 = vmatpush1.msra.mxu0 0.0
        %1305 = vmatprep.subr.mxu0 0.0
        %1306 = vmatpush1.msra.mxu0 0.0
        %1307 = vmatprep.subr.mxu0 0.0
        %1308 = vmatpush1.msra.mxu0 0.0
        %1309 = vmatprep.subr.mxu0 0.0
        %1310 = vmatpush1.msra.mxu0 0.0
        %1311 = vmatprep.subr.mxu0 0.0
        %1312 = vmatpush1.msra.mxu0 0.0
        %1313 = vmatprep.subr.mxu0 0.0
        %1314 = vmatpush1.msra.mxu0 0.0
        %1315 = vmatprep.subr.mxu0 0.0
        %1316 = vmatpush1.msra.mxu0 0.0
        %1317 = vmatprep.subr.mxu0 0.0
        %1318 = vmatpush1.msra.mxu0 0.0
        %1319 = vmatprep.subr.mxu0 0.0
        %1320 = vmatpush1.msra.mxu0 0.0
        %1321 = vmatprep.subr.mxu0 0.0
        %1322 = vmatpush1.msra.mxu0 0.0
        %1323 = vmatprep.subr.mxu0 0.0
        %1324 = vmatpush1.msra.mxu0 0.0
        %1325 = vmatprep.subr.mxu0 0.0
        %1326 = vmatpush1.msra.mxu0 0.0
        %1327 = vmatprep.mubr.f32.mxu0 0.0
        %1328 = vmatmul.mubr.f32.gmra.mrb[0].mxu0 %v1261
        %v1329 = vpop.f32.mrb[0].mxu0
        %v1330 = vadd.f32 %v1256, %v1329
        %v1331 = vpop.f32.mrb[0].mxu0
        %1332 = vdwg.mxu0
        %v1333 = vld [vmem:[#allocation10] sm:$0xff]
        %v1334 = vld [vmem:[#allocation10 + $0x8] sm:$0xff]
        %v1335 = vld [vmem:[#allocation10 + $0x10] sm:$0xff]
        %v1336 = vld [vmem:[#allocation10 + $0x18] sm:$0xff]
        %1337 = vmatprep.subr.mxu0 0.0
        %1338 = vmatpush1.msra.mxu0 %v1333
        %1339 = vmatprep.subr.mxu0 0.0
        %1340 = vmatpush1.msra.mxu0 %v1334
        %1341 = vmatprep.subr.mxu0 0.0
        %1342 = vmatpush1.msra.mxu0 %v1335
        %1343 = vmatprep.subr.mxu0 0.0
        %1344 = vmatpush1.msra.mxu0 %v1336
        %1345 = vmatprep.subr.mxu0 0.0
        %1346 = vmatpush1.msra.mxu0 0.0
        %1347 = vmatprep.subr.mxu0 0.0
        %1348 = vmatpush1.msra.mxu0 0.0
        %1349 = vmatprep.subr.mxu0 0.0
        %1350 = vmatpush1.msra.mxu0 0.0
        %1351 = vmatprep.subr.mxu0 0.0
        %1352 = vmatpush1.msra.mxu0 0.0
        %1353 = vmatprep.subr.mxu0 0.0
        %1354 = vmatpush1.msra.mxu0 0.0
        %1355 = vmatprep.subr.mxu0 0.0
        %1356 = vmatpush1.msra.mxu0 0.0
        %1357 = vmatprep.subr.mxu0 0.0
        %1358 = vmatpush1.msra.mxu0 0.0
        %1359 = vmatprep.subr.mxu0 0.0
        %1360 = vmatpush1.msra.mxu0 0.0
        %1361 = vmatprep.subr.mxu0 0.0
        %1362 = vmatpush1.msra.mxu0 0.0
        %1363 = vmatprep.subr.mxu0 0.0
        %1364 = vmatpush1.msra.mxu0 0.0
        %1365 = vmatprep.subr.mxu0 0.0
        %1366 = vmatpush1.msra.mxu0 0.0
        %1367 = vmatprep.subr.mxu0 0.0
        %1368 = vmatpush1.msra.mxu0 0.0
        %1369 = vmatprep.subr.mxu0 0.0
        %1370 = vmatpush1.msra.mxu0 0.0
        %1371 = vmatprep.subr.mxu0 0.0
        %1372 = vmatpush1.msra.mxu0 0.0
        %1373 = vmatprep.subr.mxu0 0.0
        %1374 = vmatpush1.msra.mxu0 0.0
        %1375 = vmatprep.subr.mxu0 0.0
        %1376 = vmatpush1.msra.mxu0 0.0
        %1377 = vmatprep.subr.mxu0 0.0
        %1378 = vmatpush1.msra.mxu0 0.0
        %1379 = vmatprep.subr.mxu0 0.0
        %1380 = vmatpush1.msra.mxu0 0.0
        %1381 = vmatprep.subr.mxu0 0.0
        %1382 = vmatpush1.msra.mxu0 0.0
        %1383 = vmatprep.subr.mxu0 0.0
        %1384 = vmatpush1.msra.mxu0 0.0
        %1385 = vmatprep.subr.mxu0 0.0
        %1386 = vmatpush1.msra.mxu0 0.0
        %1387 = vmatprep.subr.mxu0 0.0
        %1388 = vmatpush1.msra.mxu0 0.0
        %1389 = vmatprep.subr.mxu0 0.0
        %1390 = vmatpush1.msra.mxu0 0.0
        %1391 = vmatprep.subr.mxu0 0.0
        %1392 = vmatpush1.msra.mxu0 0.0
        %1393 = vmatprep.subr.mxu0 0.0
        %1394 = vmatpush1.msra.mxu0 0.0
        %1395 = vmatprep.subr.mxu0 0.0
        %1396 = vmatpush1.msra.mxu0 0.0
        %1397 = vmatprep.subr.mxu0 0.0
        %1398 = vmatpush1.msra.mxu0 0.0
        %1399 = vmatprep.subr.mxu0 0.0
        %1400 = vmatpush1.msra.mxu0 0.0
        %1401 = vmatprep.mubr.f32.mxu0 0.0
        %1402 = vmatmul.mubr.f32.gmra.mrb[0].mxu0 %v491
        %v1403 = vpop.f32.mrb[0].mxu0
        %v1404 = vadd.f32 0.0, %v1403
        %v1405 = vpop.f32.mrb[0].mxu0
        %1406 = vdwg.mxu0
        %v1407 = vadd.f32 %v1330, %v1404
        %v1408 = vxor.u32 %v1407, 2147483648
        %v1409 = vmul.f32 %v1408, 1.442695
        %v1410 = vpow.pop %v1409
        %v1411 = vadd.f32 %v1410, 1.0
        %v1412 = vrcp.pop %v1411
        %v1413 = vmul.f32 1.0, %v1412
        %v1414 = vmul.f32 %v1413, 2.0
        %v1415 = vsub.f32 %v1414, 1.0
        %v1416 = vmul.f32 %v1413, 0.0
        %1418 = vrot.lane.b32.xlu0 %v1415, 32
        %v1419 = vpop.permute.xlu0 %1418
        %v1421 = vmul.f32 %v1413, %v1419
        %1423 = vrot.lane.b32.xlu0 %v1421, 32
        %v1424 = vpop.permute.xlu0 %1423
        %v1426 = vadd.f32 %v1416, %v1424
        %v1427 = vtanh.pop %v1426
        %1429 = vrot.lane.b32.xlu0 %v1427, 32
        %v1430 = vpop.permute.xlu0 %1429
        %v1432 = vmul.f32 %v1413, %v1430
        %1434 = vrot.lane.b32.xlu0 %v1432, 64
        %v1435 = vpop.permute.xlu0 %1434
        %vm1437 = vcmask 253952
        %1438 = vst.msk [vmem:[#allocation2] sm:$0x1] %vm1437, %v1435
        %v1439 = vsel %vm489, %v1435, 0
        %1441 = vmatprep.subr.mxu0 0.0
        %1442 = vmatpush1.msra.mxu0 %v1333
        %1443 = vmatprep.subr.mxu0 0.0
        %1444 = vmatpush1.msra.mxu0 %v1334
        %1445 = vmatprep.subr.mxu0 0.0
        %1446 = vmatpush1.msra.mxu0 %v1335
        %1447 = vmatprep.subr.mxu0 0.0
        %1448 = vmatpush1.msra.mxu0 %v1336
        %1449 = vmatprep.subr.mxu0 0.0
        %1450 = vmatpush1.msra.mxu0 0.0
        %1451 = vmatprep.subr.mxu0 0.0
        %1452 = vmatpush1.msra.mxu0 0.0
        %1453 = vmatprep.subr.mxu0 0.0
        %1454 = vmatpush1.msra.mxu0 0.0
        %1455 = vmatprep.subr.mxu0 0.0
        %1456 = vmatpush1.msra.mxu0 0.0
        %1457 = vmatprep.subr.mxu0 0.0
        %1458 = vmatpush1.msra.mxu0 0.0
        %1459 = vmatprep.subr.mxu0 0.0
        %1460 = vmatpush1.msra.mxu0 0.0
        %1461 = vmatprep.subr.mxu0 0.0
        %1462 = vmatpush1.msra.mxu0 0.0
        %1463 = vmatprep.subr.mxu0 0.0
        %1464 = vmatpush1.msra.mxu0 0.0
        %1465 = vmatprep.subr.mxu0 0.0
        %1466 = vmatpush1.msra.mxu0 0.0
        %1467 = vmatprep.subr.mxu0 0.0
        %1468 = vmatpush1.msra.mxu0 0.0
        %1469 = vmatprep.subr.mxu0 0.0
        %1470 = vmatpush1.msra.mxu0 0.0
        %1471 = vmatprep.subr.mxu0 0.0
        %1472 = vmatpush1.msra.mxu0 0.0
        %1473 = vmatprep.subr.mxu0 0.0
        %1474 = vmatpush1.msra.mxu0 0.0
        %1475 = vmatprep.subr.mxu0 0.0
        %1476 = vmatpush1.msra.mxu0 0.0
        %1477 = vmatprep.subr.mxu0 0.0
        %1478 = vmatpush1.msra.mxu0 0.0
        %1479 = vmatprep.subr.mxu0 0.0
        %1480 = vmatpush1.msra.mxu0 0.0
        %1481 = vmatprep.subr.mxu0 0.0
        %1482 = vmatpush1.msra.mxu0 0.0
        %1483 = vmatprep.subr.mxu0 0.0
        %1484 = vmatpush1.msra.mxu0 0.0
        %1485 = vmatprep.subr.mxu0 0.0
        %1486 = vmatpush1.msra.mxu0 0.0
        %1487 = vmatprep.subr.mxu0 0.0
        %1488 = vmatpush1.msra.mxu0 0.0
        %1489 = vmatprep.subr.mxu0 0.0
        %1490 = vmatpush1.msra.mxu0 0.0
        %1491 = vmatprep.subr.mxu0 0.0
        %1492 = vmatpush1.msra.mxu0 0.0
        %1493 = vmatprep.subr.mxu0 0.0
        %1494 = vmatpush1.msra.mxu0 0.0
        %1495 = vmatprep.subr.mxu0 0.0
        %1496 = vmatpush1.msra.mxu0 0.0
        %1497 = vmatprep.subr.mxu0 0.0
        %1498 = vmatpush1.msra.mxu0 0.0
        %1499 = vmatprep.subr.mxu0 0.0
        %1500 = vmatpush1.msra.mxu0 0.0
        %1501 = vmatprep.subr.mxu0 0.0
        %1502 = vmatpush1.msra.mxu0 0.0
        %1503 = vmatprep.subr.mxu0 0.0
        %1504 = vmatpush1.msra.mxu0 0.0
        %1505 = vmatprep.mubr.f32.mxu0 0.0
        %1506 = vmatmul.mubr.f32.gmra.mrb[0].mxu0 %v1439
        %v1507 = vpop.f32.mrb[0].mxu0
        %v1508 = vadd.f32 0.0, %v1507
        %v1509 = vpop.f32.mrb[0].mxu0
        %1510 = vdwg.mxu0
        %v1512 = vrot.slane %v1508, 7
        %v1514 = vadd.f32 %v1330, %v1512
        %v1515 = vxor.u32 %v1514, 2147483648
        %v1516 = vmul.f32 %v1515, 1.442695
        %v1517 = vpow.pop %v1516
        %v1518 = vadd.f32 %v1517, 1.0
        %v1519 = vrcp.pop %v1518
        %v1520 = vmul.f32 1.0, %v1519
        %v1521 = vmul.f32 %v1520, 2.0
        %v1522 = vsub.f32 %v1521, 1.0
        %v1524 = vrot.slane %v1426, 7
        %v1526 = vmul.f32 %v1520, %v1524
        %1528 = vrot.lane.b32.xlu0 %v1522, 32
        %v1529 = vpop.permute.xlu0 %1528
        %v1531 = vmul.f32 %v1520, %v1529
        %1533 = vrot.lane.b32.xlu0 %v1531, 32
        %v1534 = vpop.permute.xlu0 %1533
        %v1536 = vadd.f32 %v1526, %v1534
        %v1537 = vtanh.pop %v1536
        %1539 = vrot.lane.b32.xlu0 %v1537, 32
        %v1540 = vpop.permute.xlu0 %1539
        %v1542 = vmul.f32 %v1520, %v1540
        %1544 = vrot.lane.b32.xlu0 %v1542, 64
        %v1545 = vpop.permute.xlu0 %1544
        %s1547 = scalar_lea.vmem [#allocation2], 1
        %vm1548 = vcmask 254977
        %1549 = vst.msk [vmem:[%s1547 - $0x1] sm:$0x2] %vm1548, %v1545
        %v1550 = vrot.slane %v1542, 1
        %1551 = vrot.lane.b32.xlu0 %v1550, 64
        %v1552 = vpop.permute.xlu0 %1551
        %v1553 = vsel %vm489, %v1552, 0
        %1555 = vmatprep.subr.mxu0 0.0
        %1556 = vmatpush1.msra.mxu0 %v1333
        %1557 = vmatprep.subr.mxu0 0.0
        %1558 = vmatpush1.msra.mxu0 %v1334
        %1559 = vmatprep.subr.mxu0 0.0
        %1560 = vmatpush1.msra.mxu0 %v1335
        %1561 = vmatprep.subr.mxu0 0.0
        %1562 = vmatpush1.msra.mxu0 %v1336
        %1563 = vmatprep.subr.mxu0 0.0
        %1564 = vmatpush1.msra.mxu0 0.0
        %1565 = vmatprep.subr.mxu0 0.0
        %1566 = vmatpush1.msra.mxu0 0.0
        %1567 = vmatprep.subr.mxu0 0.0
        %1568 = vmatpush1.msra.mxu0 0.0
        %1569 = vmatprep.subr.mxu0 0.0
        %1570 = vmatpush1.msra.mxu0 0.0
        %1571 = vmatprep.subr.mxu0 0.0
        %1572 = vmatpush1.msra.mxu0 0.0
        %1573 = vmatprep.subr.mxu0 0.0
        %1574 = vmatpush1.msra.mxu0 0.0
        %1575 = vmatprep.subr.mxu0 0.0
        %1576 = vmatpush1.msra.mxu0 0.0
        %1577 = vmatprep.subr.mxu0 0.0
        %1578 = vmatpush1.msra.mxu0 0.0
        %1579 = vmatprep.subr.mxu0 0.0
        %1580 = vmatpush1.msra.mxu0 0.0
        %1581 = vmatprep.subr.mxu0 0.0
        %1582 = vmatpush1.msra.mxu0 0.0
        %1583 = vmatprep.subr.mxu0 0.0
        %1584 = vmatpush1.msra.mxu0 0.0
        %1585 = vmatprep.subr.mxu0 0.0
        %1586 = vmatpush1.msra.mxu0 0.0
        %1587 = vmatprep.subr.mxu0 0.0
        %1588 = vmatpush1.msra.mxu0 0.0
        %1589 = vmatprep.subr.mxu0 0.0
        %1590 = vmatpush1.msra.mxu0 0.0
        %1591 = vmatprep.subr.mxu0 0.0
        %1592 = vmatpush1.msra.mxu0 0.0
        %1593 = vmatprep.subr.mxu0 0.0
        %1594 = vmatpush1.msra.mxu0 0.0
        %1595 = vmatprep.subr.mxu0 0.0
        %1596 = vmatpush1.msra.mxu0 0.0
        %1597 = vmatprep.subr.mxu0 0.0
        %1598 = vmatpush1.msra.mxu0 0.0
        %1599 = vmatprep.subr.mxu0 0.0
        %1600 = vmatpush1.msra.mxu0 0.0
        %1601 = vmatprep.subr.mxu0 0.0
        %1602 = vmatpush1.msra.mxu0 0.0
        %1603 = vmatprep.subr.mxu0 0.0
        %1604 = vmatpush1.msra.mxu0 0.0
        %1605 = vmatprep.subr.mxu0 0.0
        %1606 = vmatpush1.msra.mxu0 0.0
        %1607 = vmatprep.subr.mxu0 0.0
        %1608 = vmatpush1.msra.mxu0 0.0
        %1609 = vmatprep.subr.mxu0 0.0
        %1610 = vmatpush1.msra.mxu0 0.0
        %1611 = vmatprep.subr.mxu0 0.0
        %1612 = vmatpush1.msra.mxu0 0.0
        %1613 = vmatprep.subr.mxu0 0.0
        %1614 = vmatpush1.msra.mxu0 0.0
        %1615 = vmatprep.subr.mxu0 0.0
        %1616 = vmatpush1.msra.mxu0 0.0
        %1617 = vmatprep.subr.mxu0 0.0
        %1618 = vmatpush1.msra.mxu0 0.0
        %1619 = vmatprep.mubr.f32.mxu0 0.0
        %1620 = vmatmul.mubr.f32.gmra.mrb[0].mxu0 %v1553
        %v1621 = vpop.f32.mrb[0].mxu0
        %v1622 = vadd.f32 0.0, %v1621
        %v1623 = vpop.f32.mrb[0].mxu0
        %1624 = vdwg.mxu0
        %v1626 = vrot.slane %v1622, 6
        %v1628 = vadd.f32 %v1330, %v1626
        %v1629 = vxor.u32 %v1628, 2147483648
        %v1630 = vmul.f32 %v1629, 1.442695
        %v1631 = vpow.pop %v1630
        %v1632 = vadd.f32 %v1631, 1.0
        %v1633 = vrcp.pop %v1632
        %v1634 = vmul.f32 1.0, %v1633
        %v1635 = vmul.f32 %v1634, 2.0
        %v1636 = vsub.f32 %v1635, 1.0
        %v1638 = vrot.slane %v1536, 7
        %v1640 = vmul.f32 %v1634, %v1638
        %1642 = vrot.lane.b32.xlu0 %v1636, 32
        %v1643 = vpop.permute.xlu0 %1642
        %v1645 = vmul.f32 %v1634, %v1643
        %1647 = vrot.lane.b32.xlu0 %v1645, 32
        %v1648 = vpop.permute.xlu0 %1647
        %v1650 = vadd.f32 %v1640, %v1648
        %v1651 = vtanh.pop %v1650
        %1653 = vrot.lane.b32.xlu0 %v1651, 32
        %v1654 = vpop.permute.xlu0 %1653
        %v1656 = vmul.f32 %v1634, %v1654
        %1658 = vrot.lane.b32.xlu0 %v1656, 64
        %v1659 = vpop.permute.xlu0 %1658
        %s1661 = scalar_lea.vmem [#allocation2], 2
        %vm1662 = vcmask 256002
        %1663 = vst.msk [vmem:[%s1661 - $0x2] sm:$0x4] %vm1662, %v1659
        %v1664 = vrot.slane %v1656, 2
        %1665 = vrot.lane.b32.xlu0 %v1664, 64
        %v1666 = vpop.permute.xlu0 %1665
        %v1667 = vsel %vm489, %v1666, 0
        %1669 = vmatprep.subr.mxu0 0.0
        %1670 = vmatpush1.msra.mxu0 %v1333
        %1671 = vmatprep.subr.mxu0 0.0
        %1672 = vmatpush1.msra.mxu0 %v1334
        %1673 = vmatprep.subr.mxu0 0.0
        %1674 = vmatpush1.msra.mxu0 %v1335
        %1675 = vmatprep.subr.mxu0 0.0
        %1676 = vmatpush1.msra.mxu0 %v1336
        %1677 = vmatprep.subr.mxu0 0.0
        %1678 = vmatpush1.msra.mxu0 0.0
        %1679 = vmatprep.subr.mxu0 0.0
        %1680 = vmatpush1.msra.mxu0 0.0
        %1681 = vmatprep.subr.mxu0 0.0
        %1682 = vmatpush1.msra.mxu0 0.0
        %1683 = vmatprep.subr.mxu0 0.0
        %1684 = vmatpush1.msra.mxu0 0.0
        %1685 = vmatprep.subr.mxu0 0.0
        %1686 = vmatpush1.msra.mxu0 0.0
        %1687 = vmatprep.subr.mxu0 0.0
        %1688 = vmatpush1.msra.mxu0 0.0
        %1689 = vmatprep.subr.mxu0 0.0
        %1690 = vmatpush1.msra.mxu0 0.0
        %1691 = vmatprep.subr.mxu0 0.0
        %1692 = vmatpush1.msra.mxu0 0.0
        %1693 = vmatprep.subr.mxu0 0.0
        %1694 = vmatpush1.msra.mxu0 0.0
        %1695 = vmatprep.subr.mxu0 0.0
        %1696 = vmatpush1.msra.mxu0 0.0
        %1697 = vmatprep.subr.mxu0 0.0
        %1698 = vmatpush1.msra.mxu0 0.0
        %1699 = vmatprep.subr.mxu0 0.0
        %1700 = vmatpush1.msra.mxu0 0.0
        %1701 = vmatprep.subr.mxu0 0.0
        %1702 = vmatpush1.msra.mxu0 0.0
        %1703 = vmatprep.subr.mxu0 0.0
        %1704 = vmatpush1.msra.mxu0 0.0
        %1705 = vmatprep.subr.mxu0 0.0
        %1706 = vmatpush1.msra.mxu0 0.0
        %1707 = vmatprep.subr.mxu0 0.0
        %1708 = vmatpush1.msra.mxu0 0.0
        %1709 = vmatprep.subr.mxu0 0.0
        %1710 = vmatpush1.msra.mxu0 0.0
        %1711 = vmatprep.subr.mxu0 0.0
        %1712 = vmatpush1.msra.mxu0 0.0
        %1713 = vmatprep.subr.mxu0 0.0
        %1714 = vmatpush1.msra.mxu0 0.0
        %1715 = vmatprep.subr.mxu0 0.0
        %1716 = vmatpush1.msra.mxu0 0.0
        %1717 = vmatprep.subr.mxu0 0.0
        %1718 = vmatpush1.msra.mxu0 0.0
        %1719 = vmatprep.subr.mxu0 0.0
        %1720 = vmatpush1.msra.mxu0 0.0
        %1721 = vmatprep.subr.mxu0 0.0
        %1722 = vmatpush1.msra.mxu0 0.0
        %1723 = vmatprep.subr.mxu0 0.0
        %1724 = vmatpush1.msra.mxu0 0.0
        %1725 = vmatprep.subr.mxu0 0.0
        %1726 = vmatpush1.msra.mxu0 0.0
        %1727 = vmatprep.subr.mxu0 0.0
        %1728 = vmatpush1.msra.mxu0 0.0
        %1729 = vmatprep.subr.mxu0 0.0
        %1730 = vmatpush1.msra.mxu0 0.0
        %1731 = vmatprep.subr.mxu0 0.0
        %1732 = vmatpush1.msra.mxu0 0.0
        %1733 = vmatprep.mubr.f32.mxu0 0.0
        %1734 = vmatmul.mubr.f32.gmra.mrb[0].mxu0 %v1667
        %v1735 = vpop.f32.mrb[0].mxu0
        %v1736 = vadd.f32 0.0, %v1735
        %v1737 = vpop.f32.mrb[0].mxu0
        %1738 = vdwg.mxu0
        %v1740 = vrot.slane %v1736, 5
        %v1742 = vadd.f32 %v1330, %v1740
        %v1743 = vxor.u32 %v1742, 2147483648
        %v1744 = vmul.f32 %v1743, 1.442695
        %v1745 = vpow.pop %v1744
        %v1746 = vadd.f32 %v1745, 1.0
        %v1747 = vrcp.pop %v1746
        %v1748 = vmul.f32 1.0, %v1747
        %v1749 = vmul.f32 %v1748, 2.0
        %v1750 = vsub.f32 %v1749, 1.0
        %v1752 = vrot.slane %v1650, 7
        %v1754 = vmul.f32 %v1748, %v1752
        %1756 = vrot.lane.b32.xlu0 %v1750, 32
        %v1757 = vpop.permute.xlu0 %1756
        %v1759 = vmul.f32 %v1748, %v1757
        %1761 = vrot.lane.b32.xlu0 %v1759, 32
        %v1762 = vpop.permute.xlu0 %1761
        %v1764 = vadd.f32 %v1754, %v1762
        %v1765 = vtanh.pop %v1764
        %1767 = vrot.lane.b32.xlu0 %v1765, 32
        %v1768 = vpop.permute.xlu0 %1767
        %v1770 = vmul.f32 %v1748, %v1768
        %1772 = vrot.lane.b32.xlu0 %v1770, 64
        %v1773 = vpop.permute.xlu0 %1772
        %s1775 = scalar_lea.vmem [#allocation2], 3
        %vm1776 = vcmask 257027
        %1777 = vst.msk [vmem:[%s1775 - $0x3] sm:$0x8] %vm1776, %v1773
        %v1778 = vrot.slane %v1770, 3
        %1779 = vrot.lane.b32.xlu0 %v1778, 64
        %v1780 = vpop.permute.xlu0 %1779
        %v1781 = vsel %vm489, %v1780, 0
        %1783 = vmatprep.subr.mxu0 0.0
        %1784 = vmatpush1.msra.mxu0 %v1333
        %1785 = vmatprep.subr.mxu0 0.0
        %1786 = vmatpush1.msra.mxu0 %v1334
        %1787 = vmatprep.subr.mxu0 0.0
        %1788 = vmatpush1.msra.mxu0 %v1335
        %1789 = vmatprep.subr.mxu0 0.0
        %1790 = vmatpush1.msra.mxu0 %v1336
        %1791 = vmatprep.subr.mxu0 0.0
        %1792 = vmatpush1.msra.mxu0 0.0
        %1793 = vmatprep.subr.mxu0 0.0
        %1794 = vmatpush1.msra.mxu0 0.0
        %1795 = vmatprep.subr.mxu0 0.0
        %1796 = vmatpush1.msra.mxu0 0.0
        %1797 = vmatprep.subr.mxu0 0.0
        %1798 = vmatpush1.msra.mxu0 0.0
        %1799 = vmatprep.subr.mxu0 0.0
        %1800 = vmatpush1.msra.mxu0 0.0
        %1801 = vmatprep.subr.mxu0 0.0
        %1802 = vmatpush1.msra.mxu0 0.0
        %1803 = vmatprep.subr.mxu0 0.0
        %1804 = vmatpush1.msra.mxu0 0.0
        %1805 = vmatprep.subr.mxu0 0.0
        %1806 = vmatpush1.msra.mxu0 0.0
        %1807 = vmatprep.subr.mxu0 0.0
        %1808 = vmatpush1.msra.mxu0 0.0
        %1809 = vmatprep.subr.mxu0 0.0
        %1810 = vmatpush1.msra.mxu0 0.0
        %1811 = vmatprep.subr.mxu0 0.0
        %1812 = vmatpush1.msra.mxu0 0.0
        %1813 = vmatprep.subr.mxu0 0.0
        %1814 = vmatpush1.msra.mxu0 0.0
        %1815 = vmatprep.subr.mxu0 0.0
        %1816 = vmatpush1.msra.mxu0 0.0
        %1817 = vmatprep.subr.mxu0 0.0
        %1818 = vmatpush1.msra.mxu0 0.0
        %1819 = vmatprep.subr.mxu0 0.0
        %1820 = vmatpush1.msra.mxu0 0.0
        %1821 = vmatprep.subr.mxu0 0.0
        %1822 = vmatpush1.msra.mxu0 0.0
        %1823 = vmatprep.subr.mxu0 0.0
        %1824 = vmatpush1.msra.mxu0 0.0
        %1825 = vmatprep.subr.mxu0 0.0
        %1826 = vmatpush1.msra.mxu0 0.0
        %1827 = vmatprep.subr.mxu0 0.0
        %1828 = vmatpush1.msra.mxu0 0.0
        %1829 = vmatprep.subr.mxu0 0.0
        %1830 = vmatpush1.msra.mxu0 0.0
        %1831 = vmatprep.subr.mxu0 0.0
        %1832 = vmatpush1.msra.mxu0 0.0
        %1833 = vmatprep.subr.mxu0 0.0
        %1834 = vmatpush1.msra.mxu0 0.0
        %1835 = vmatprep.subr.mxu0 0.0
        %1836 = vmatpush1.msra.mxu0 0.0
        %1837 = vmatprep.subr.mxu0 0.0
        %1838 = vmatpush1.msra.mxu0 0.0
        %1839 = vmatprep.subr.mxu0 0.0
        %1840 = vmatpush1.msra.mxu0 0.0
        %1841 = vmatprep.subr.mxu0 0.0
        %1842 = vmatpush1.msra.mxu0 0.0
        %1843 = vmatprep.subr.mxu0 0.0
        %1844 = vmatpush1.msra.mxu0 0.0
        %1845 = vmatprep.subr.mxu0 0.0
        %1846 = vmatpush1.msra.mxu0 0.0
        %1847 = vmatprep.mubr.f32.mxu0 0.0
        %1848 = vmatmul.mubr.f32.gmra.mrb[0].mxu0 %v1781
        %v1849 = vpop.f32.mrb[0].mxu0
        %v1850 = vadd.f32 0.0, %v1849
        %v1851 = vpop.f32.mrb[0].mxu0
        %1852 = vdwg.mxu0
        %v1854 = vrot.slane %v1850, 4
        %v1856 = vadd.f32 %v1330, %v1854
        %v1857 = vxor.u32 %v1856, 2147483648
        %v1858 = vmul.f32 %v1857, 1.442695
        %v1859 = vpow.pop %v1858
        %v1860 = vadd.f32 %v1859, 1.0
        %v1861 = vrcp.pop %v1860
        %v1862 = vmul.f32 1.0, %v1861
        %v1863 = vmul.f32 %v1862, 2.0
        %v1864 = vsub.f32 %v1863, 1.0
        %v1866 = vrot.slane %v1764, 7
        %v1868 = vmul.f32 %v1862, %v1866
        %1870 = vrot.lane.b32.xlu0 %v1864, 32
        %v1871 = vpop.permute.xlu0 %1870
        %v1873 = vmul.f32 %v1862, %v1871
        %1875 = vrot.lane.b32.xlu0 %v1873, 32
        %v1876 = vpop.permute.xlu0 %1875
        %v1878 = vadd.f32 %v1868, %v1876
        %v1879 = vtanh.pop %v1878
        %1881 = vrot.lane.b32.xlu0 %v1879, 32
        %v1882 = vpop.permute.xlu0 %1881
        %v1884 = vmul.f32 %v1862, %v1882
        %1886 = vrot.lane.b32.xlu0 %v1884, 64
        %v1887 = vpop.permute.xlu0 %1886
        %s1889 = scalar_lea.vmem [#allocation2], 4
        %vm1890 = vcmask 258052
        %1891 = vst.msk [vmem:[%s1889 - $0x4] sm:$0x10] %vm1890, %v1887
        %v1892 = vrot.slane %v1884, 4
        %1893 = vrot.lane.b32.xlu0 %v1892, 64
        %v1894 = vpop.permute.xlu0 %1893
        %v1895 = vsel %vm489, %v1894, 0
        %1897 = vmatprep.subr.mxu0 0.0
        %1898 = vmatpush1.msra.mxu0 %v1333
        %1899 = vmatprep.subr.mxu0 0.0
        %1900 = vmatpush1.msra.mxu0 %v1334
        %1901 = vmatprep.subr.mxu0 0.0
        %1902 = vmatpush1.msra.mxu0 %v1335
        %1903 = vmatprep.subr.mxu0 0.0
        %1904 = vmatpush1.msra.mxu0 %v1336
        %1905 = vmatprep.subr.mxu0 0.0
        %1906 = vmatpush1.msra.mxu0 0.0
        %1907 = vmatprep.subr.mxu0 0.0
        %1908 = vmatpush1.msra.mxu0 0.0
        %1909 = vmatprep.subr.mxu0 0.0
        %1910 = vmatpush1.msra.mxu0 0.0
        %1911 = vmatprep.subr.mxu0 0.0
        %1912 = vmatpush1.msra.mxu0 0.0
        %1913 = vmatprep.subr.mxu0 0.0
        %1914 = vmatpush1.msra.mxu0 0.0
        %1915 = vmatprep.subr.mxu0 0.0
        %1916 = vmatpush1.msra.mxu0 0.0
        %1917 = vmatprep.subr.mxu0 0.0
        %1918 = vmatpush1.msra.mxu0 0.0
        %1919 = vmatprep.subr.mxu0 0.0
        %1920 = vmatpush1.msra.mxu0 0.0
        %1921 = vmatprep.subr.mxu0 0.0
        %1922 = vmatpush1.msra.mxu0 0.0
        %1923 = vmatprep.subr.mxu0 0.0
        %1924 = vmatpush1.msra.mxu0 0.0
        %1925 = vmatprep.subr.mxu0 0.0
        %1926 = vmatpush1.msra.mxu0 0.0
        %1927 = vmatprep.subr.mxu0 0.0
        %1928 = vmatpush1.msra.mxu0 0.0
        %1929 = vmatprep.subr.mxu0 0.0
        %1930 = vmatpush1.msra.mxu0 0.0
        %1931 = vmatprep.subr.mxu0 0.0
        %1932 = vmatpush1.msra.mxu0 0.0
        %1933 = vmatprep.subr.mxu0 0.0
        %1934 = vmatpush1.msra.mxu0 0.0
        %1935 = vmatprep.subr.mxu0 0.0
        %1936 = vmatpush1.msra.mxu0 0.0
        %1937 = vmatprep.subr.mxu0 0.0
        %1938 = vmatpush1.msra.mxu0 0.0
        %1939 = vmatprep.subr.mxu0 0.0
        %1940 = vmatpush1.msra.mxu0 0.0
        %1941 = vmatprep.subr.mxu0 0.0
        %1942 = vmatpush1.msra.mxu0 0.0
        %1943 = vmatprep.subr.mxu0 0.0
        %1944 = vmatpush1.msra.mxu0 0.0
        %1945 = vmatprep.subr.mxu0 0.0
        %1946 = vmatpush1.msra.mxu0 0.0
        %1947 = vmatprep.subr.mxu0 0.0
        %1948 = vmatpush1.msra.mxu0 0.0
        %1949 = vmatprep.subr.mxu0 0.0
        %1950 = vmatpush1.msra.mxu0 0.0
        %1951 = vmatprep.subr.mxu0 0.0
        %1952 = vmatpush1.msra.mxu0 0.0
        %1953 = vmatprep.subr.mxu0 0.0
        %1954 = vmatpush1.msra.mxu0 0.0
        %1955 = vmatprep.subr.mxu0 0.0
        %1956 = vmatpush1.msra.mxu0 0.0
        %1957 = vmatprep.subr.mxu0 0.0
        %1958 = vmatpush1.msra.mxu0 0.0
        %1959 = vmatprep.subr.mxu0 0.0
        %1960 = vmatpush1.msra.mxu0 0.0
        %1961 = vmatprep.mubr.f32.mxu0 0.0
        %1962 = vmatmul.mubr.f32.gmra.mrb[0].mxu0 %v1895
        %v1963 = vpop.f32.mrb[0].mxu0
        %v1964 = vadd.f32 0.0, %v1963
        %v1965 = vpop.f32.mrb[0].mxu0
        %1966 = vdwg.mxu0
        %v1968 = vrot.slane %v1964, 3
        %v1970 = vadd.f32 %v1330, %v1968
        %v1971 = vxor.u32 %v1970, 2147483648
        %v1972 = vmul.f32 %v1971, 1.442695
        %v1973 = vpow.pop %v1972
        %v1974 = vadd.f32 %v1973, 1.0
        %v1975 = vrcp.pop %v1974
        %v1976 = vmul.f32 1.0, %v1975
        %v1977 = vmul.f32 %v1976, 2.0
        %v1978 = vsub.f32 %v1977, 1.0
        %v1980 = vrot.slane %v1878, 7
        %v1982 = vmul.f32 %v1976, %v1980
        %1984 = vrot.lane.b32.xlu0 %v1978, 32
        %v1985 = vpop.permute.xlu0 %1984
        %v1987 = vmul.f32 %v1976, %v1985
        %1989 = vrot.lane.b32.xlu0 %v1987, 32
        %v1990 = vpop.permute.xlu0 %1989
        %v1992 = vadd.f32 %v1982, %v1990
        %v1993 = vtanh.pop %v1992
        %1995 = vrot.lane.b32.xlu0 %v1993, 32
        %v1996 = vpop.permute.xlu0 %1995
        %v1998 = vmul.f32 %v1976, %v1996
        %2000 = vrot.lane.b32.xlu0 %v1998, 64
        %v2001 = vpop.permute.xlu0 %2000
        %s2003 = scalar_lea.vmem [#allocation2], 5
        %vm2004 = vcmask 259077
        %2005 = vst.msk [vmem:[%s2003 - $0x5] sm:$0x20] %vm2004, %v2001
        %v2006 = vrot.slane %v1998, 5
        %2007 = vrot.lane.b32.xlu0 %v2006, 64
        %v2008 = vpop.permute.xlu0 %2007
        %v2009 = vsel %vm489, %v2008, 0
        %2011 = vmatprep.subr.mxu0 0.0
        %2012 = vmatpush1.msra.mxu0 %v1333
        %2013 = vmatprep.subr.mxu0 0.0
        %2014 = vmatpush1.msra.mxu0 %v1334
        %2015 = vmatprep.subr.mxu0 0.0
        %2016 = vmatpush1.msra.mxu0 %v1335
        %2017 = vmatprep.subr.mxu0 0.0
        %2018 = vmatpush1.msra.mxu0 %v1336
        %2019 = vmatprep.subr.mxu0 0.0
        %2020 = vmatpush1.msra.mxu0 0.0
        %2021 = vmatprep.subr.mxu0 0.0
        %2022 = vmatpush1.msra.mxu0 0.0
        %2023 = vmatprep.subr.mxu0 0.0
        %2024 = vmatpush1.msra.mxu0 0.0
        %2025 = vmatprep.subr.mxu0 0.0
        %2026 = vmatpush1.msra.mxu0 0.0
        %2027 = vmatprep.subr.mxu0 0.0
        %2028 = vmatpush1.msra.mxu0 0.0
        %2029 = vmatprep.subr.mxu0 0.0
        %2030 = vmatpush1.msra.mxu0 0.0
        %2031 = vmatprep.subr.mxu0 0.0
        %2032 = vmatpush1.msra.mxu0 0.0
        %2033 = vmatprep.subr.mxu0 0.0
        %2034 = vmatpush1.msra.mxu0 0.0
        %2035 = vmatprep.subr.mxu0 0.0
        %2036 = vmatpush1.msra.mxu0 0.0
        %2037 = vmatprep.subr.mxu0 0.0
        %2038 = vmatpush1.msra.mxu0 0.0
        %2039 = vmatprep.subr.mxu0 0.0
        %2040 = vmatpush1.msra.mxu0 0.0
        %2041 = vmatprep.subr.mxu0 0.0
        %2042 = vmatpush1.msra.mxu0 0.0
        %2043 = vmatprep.subr.mxu0 0.0
        %2044 = vmatpush1.msra.mxu0 0.0
        %2045 = vmatprep.subr.mxu0 0.0
        %2046 = vmatpush1.msra.mxu0 0.0
        %2047 = vmatprep.subr.mxu0 0.0
        %2048 = vmatpush1.msra.mxu0 0.0
        %2049 = vmatprep.subr.mxu0 0.0
        %2050 = vmatpush1.msra.mxu0 0.0
        %2051 = vmatprep.subr.mxu0 0.0
        %2052 = vmatpush1.msra.mxu0 0.0
        %2053 = vmatprep.subr.mxu0 0.0
        %2054 = vmatpush1.msra.mxu0 0.0
        %2055 = vmatprep.subr.mxu0 0.0
        %2056 = vmatpush1.msra.mxu0 0.0
        %2057 = vmatprep.subr.mxu0 0.0
        %2058 = vmatpush1.msra.mxu0 0.0
        %2059 = vmatprep.subr.mxu0 0.0
        %2060 = vmatpush1.msra.mxu0 0.0
        %2061 = vmatprep.subr.mxu0 0.0
        %2062 = vmatpush1.msra.mxu0 0.0
        %2063 = vmatprep.subr.mxu0 0.0
        %2064 = vmatpush1.msra.mxu0 0.0
        %2065 = vmatprep.subr.mxu0 0.0
        %2066 = vmatpush1.msra.mxu0 0.0
        %2067 = vmatprep.subr.mxu0 0.0
        %2068 = vmatpush1.msra.mxu0 0.0
        %2069 = vmatprep.subr.mxu0 0.0
        %2070 = vmatpush1.msra.mxu0 0.0
        %2071 = vmatprep.subr.mxu0 0.0
        %2072 = vmatpush1.msra.mxu0 0.0
        %2073 = vmatprep.subr.mxu0 0.0
        %2074 = vmatpush1.msra.mxu0 0.0
        %2075 = vmatprep.mubr.f32.mxu0 0.0
        %2076 = vmatmul.mubr.f32.gmra.mrb[0].mxu0 %v2009
        %v2077 = vpop.f32.mrb[0].mxu0
        %v2078 = vadd.f32 0.0, %v2077
        %v2079 = vpop.f32.mrb[0].mxu0
        %2080 = vdwg.mxu0
        %v2082 = vrot.slane %v2078, 2
        %v2084 = vadd.f32 %v1330, %v2082
        %v2085 = vxor.u32 %v2084, 2147483648
        %v2086 = vmul.f32 %v2085, 1.442695
        %v2087 = vpow.pop %v2086
        %v2088 = vadd.f32 %v2087, 1.0
        %v2089 = vrcp.pop %v2088
        %v2090 = vmul.f32 1.0, %v2089
        %v2091 = vmul.f32 %v2090, 2.0
        %v2092 = vsub.f32 %v2091, 1.0
        %v2094 = vrot.slane %v1992, 7
        %v2096 = vmul.f32 %v2090, %v2094
        %2098 = vrot.lane.b32.xlu0 %v2092, 32
        %v2099 = vpop.permute.xlu0 %2098
        %v2101 = vmul.f32 %v2090, %v2099
        %2103 = vrot.lane.b32.xlu0 %v2101, 32
        %v2104 = vpop.permute.xlu0 %2103
        %v2106 = vadd.f32 %v2096, %v2104
        %v2107 = vtanh.pop %v2106
        %2109 = vrot.lane.b32.xlu0 %v2107, 32
        %v2110 = vpop.permute.xlu0 %2109
        %v2112 = vmul.f32 %v2090, %v2110
        %2114 = vrot.lane.b32.xlu0 %v2112, 64
        %v2115 = vpop.permute.xlu0 %2114
        %s2117 = scalar_lea.vmem [#allocation2], 6
        %vm2118 = vcmask 260102
        %2119 = vst.msk [vmem:[%s2117 - $0x6] sm:$0x40] %vm2118, %v2115
        %s2120 = sld [smem:[#allocation4 + %s33]]
        %s2121 = scalar_lea.vmem [#allocation2], %s2120
        %v2122 = vld [vmem:[%s2121] sm:$0x1]
        %v2123 = vld [vmem:[%s2121 + $0x1] sm:$0x1]
        %v2124 = vtanh.pop %v2122
        %v2125 = vtanh.pop %v2123
        %v2126 = vld [vmem:[#allocation11] sm:$0xff]
        %v2127 = vld [vmem:[#allocation11 + $0x8] sm:$0xff]
        %v2128 = vld [vmem:[#allocation11 + $0x10] sm:$0xff]
        %v2129 = vld [vmem:[#allocation11 + $0x18] sm:$0xff]
        %v2130 = vld [vmem:[%s9] sm:$0x1]
        %v2132 = vlaneseq
        %v2133 = vshrl.u32 %v2132, 7
        %v2134 = vsub.s32 0, %v2133
        %v2135 = vrot.slane %v2130, %v2134
        %v2139 = vcombine.low %v2124, %v2125
        %v2141 = vunpack.c.l.s4 1966171168
        %v2142 = vunpack.c.0.s8 %v2141
        %v2143 = vlaneseq
        %v2144 = vshrl.u32 %v2143, 7
        %v2145 = vsub.s32 %v2142, %v2144
        %v2146 = vrot.slane %v2139, %v2145
        %v2148 = vunpack.c.l.s4 1966171168
        %v2149 = vunpack.c.0.s8 %v2148
        %v2150 = vlaneseq
        %v2151 = vshrl.u32 %v2150, 7
        %v2152 = vsub.s32 %v2149, %v2151
        %v2153 = vrot.slane %v2146, %v2152
        %v2154 = vsel %vm489, %v2153, 0
        %2156 = vmatprep.subr.mxu0 0.0
        %2157 = vmatpush1.msra.mxu0 %v2126
        %2158 = vmatprep.subr.mxu0 0.0
        %2159 = vmatpush1.msra.mxu0 %v2127
        %2160 = vmatprep.subr.mxu0 0.0
        %2161 = vmatpush1.msra.mxu0 %v2128
        %2162 = vmatprep.subr.mxu0 0.0
        %2163 = vmatpush1.msra.mxu0 %v2129
        %2164 = vmatprep.subr.mxu0 0.0
        %2165 = vmatpush1.msra.mxu0 0.0
        %2166 = vmatprep.subr.mxu0 0.0
        %2167 = vmatpush1.msra.mxu0 0.0
        %2168 = vmatprep.subr.mxu0 0.0
        %2169 = vmatpush1.msra.mxu0 0.0
        %2170 = vmatprep.subr.mxu0 0.0
        %2171 = vmatpush1.msra.mxu0 0.0
        %2172 = vmatprep.subr.mxu0 0.0
        %2173 = vmatpush1.msra.mxu0 0.0
        %2174 = vmatprep.subr.mxu0 0.0
        %2175 = vmatpush1.msra.mxu0 0.0
        %2176 = vmatprep.subr.mxu0 0.0
        %2177 = vmatpush1.msra.mxu0 0.0
        %2178 = vmatprep.subr.mxu0 0.0
        %2179 = vmatpush1.msra.mxu0 0.0
        %2180 = vmatprep.subr.mxu0 0.0
        %2181 = vmatpush1.msra.mxu0 0.0
        %2182 = vmatprep.subr.mxu0 0.0
        %2183 = vmatpush1.msra.mxu0 0.0
        %2184 = vmatprep.subr.mxu0 0.0
        %2185 = vmatpush1.msra.mxu0 0.0
        %2186 = vmatprep.subr.mxu0 0.0
        %2187 = vmatpush1.msra.mxu0 0.0
        %2188 = vmatprep.subr.mxu0 0.0
        %2189 = vmatpush1.msra.mxu0 0.0
        %2190 = vmatprep.subr.mxu0 0.0
        %2191 = vmatpush1.msra.mxu0 0.0
        %2192 = vmatprep.subr.mxu0 0.0
        %2193 = vmatpush1.msra.mxu0 0.0
        %2194 = vmatprep.subr.mxu0 0.0
        %2195 = vmatpush1.msra.mxu0 0.0
        %2196 = vmatprep.subr.mxu0 0.0
        %2197 = vmatpush1.msra.mxu0 0.0
        %2198 = vmatprep.subr.mxu0 0.0
        %2199 = vmatpush1.msra.mxu0 0.0
        %2200 = vmatprep.subr.mxu0 0.0
        %2201 = vmatpush1.msra.mxu0 0.0
        %2202 = vmatprep.subr.mxu0 0.0
        %2203 = vmatpush1.msra.mxu0 0.0
        %2204 = vmatprep.subr.mxu0 0.0
        %2205 = vmatpush1.msra.mxu0 0.0
        %2206 = vmatprep.subr.mxu0 0.0
        %2207 = vmatpush1.msra.mxu0 0.0
        %2208 = vmatprep.subr.mxu0 0.0
        %2209 = vmatpush1.msra.mxu0 0.0
        %2210 = vmatprep.subr.mxu0 0.0
        %2211 = vmatpush1.msra.mxu0 0.0
        %2212 = vmatprep.subr.mxu0 0.0
        %2213 = vmatpush1.msra.mxu0 0.0
        %2214 = vmatprep.subr.mxu0 0.0
        %2215 = vmatpush1.msra.mxu0 0.0
        %2216 = vmatprep.subr.mxu0 0.0
        %2217 = vmatpush1.msra.mxu0 0.0
        %2218 = vmatprep.subr.mxu0 0.0
        %2219 = vmatpush1.msra.mxu0 0.0
        %2220 = vmatprep.mubr.f32.mxu0 0.0
        %2221 = vmatmul.mubr.f32.gmra.mrb[0].mxu0 %v2154
        %v2222 = vpop.f32.mrb[0].mxu0
        %v2223 = vadd.f32 %v2135, %v2222
        %v2224 = vpop.f32.mrb[0].mxu0
        %2225 = vdwg.mxu0
        %2226 = vst [vmem:[%s389] sm:$0x3] %v2223
        %s2227 = sand.u32 %s235, 1
        %s2228 = scalar_lea.sflag [#allocation7], %s2227
        %s2229 = sand.u32 %s235, 1
        %s2230 = smul.addr %s2229, 2
        %s2231 = scalar_lea.vmem [#allocation13], %s2230
        // Predicated region
        $region73: #{tpu_custom_call.1} parent=55 // pred_check
          %p2232 = pneg %p245
        $region74: #{tpu_custom_call.1} parent=55 // pred_check_branch
          %2234 = sbr.rel (%p2232) target = $region76
        $region75: #{tpu_custom_call.1} parent=55 // pred_region
          %s2236 = ssub.s32 32, 32
          %2237 = vsyncadd %s2228, %s2236
          %s2238 = smul.addr %s33, 32
          %s2239 = scalar_lea.hbm %s10, %s2238
          %s2241 = sshll.u32 %s2231, 4
          %s2242 = int_to_ptr.vmem [resolvable:$true] %s2241
          %2244 = dma.vmem_to_hbm [thread:$0]  %s2242, 32, %s2239, %s2228
        $region76: #{tpu_custom_call.1} parent=55 // pred_fallthru
          _
      $region56: #{tpu_custom_call.1} parent=5 // pred_fallthru
        _
      %p2245 = scmp.le.s32.totalorder 2, %s28
      // Predicated region
      $region77: #{tpu_custom_call.1} parent=5 // pred_check
        %p2246 = pneg %p2245
      $region78: #{tpu_custom_call.1} parent=5 // pred_check_branch
        %2248 = sbr.rel (%p2246) target = $region80
      $region79: #{tpu_custom_call.1} parent=5 // pred_region
        %s2249 = ssub.s32 %s28, 2
        // Predicated region
        $region81: #{tpu_custom_call.1} parent=79 // pred_check
          %p2250 = pneg %p251
        $region82: #{tpu_custom_call.1} parent=79 // pred_check_branch
          %2252 = sbr.rel (%p2250) target = $region84
        $region83: #{tpu_custom_call.1} parent=79 // pred_region
          %s2253 = sand.u32 %s236, 1
          %s2254 = scalar_lea.sflag [#allocation7], %s2253
          %s2255 = sand.u32 %s236, 1
          %s2256 = smul.addr %s2255, 2
          %s2257 = scalar_lea.vmem [#allocation13], %s2256
          %2258 = dma.done %s2254, 32
        $region84: #{tpu_custom_call.1} parent=79 // pred_fallthru
          _
      $region80: #{tpu_custom_call.1} parent=5 // pred_fallthru
        _
    $region6: #{tpu_custom_call.1} parent=1 // loop_footer
      %s32 = sadd.s32 1, %s28
    $region7: #{tpu_custom_call.1} parent=1 // loop_footer_branch
      %27 = sbr.rel target = $region3
    $region8: #{tpu_custom_call.1} parent=1 // loop_exit
      _
    %2259 = vsyncpa [#allocation6], 1
    %s2260 = scalar_lea.sflag [#allocation6], 1
    %2261 = vsyncpa %s2260, 1
    %2262 = vsyncpa [#allocation9], 1
    %2263 = vsyncpa [#allocation12], 1
    %2264 = vsyncpa [#allocation7], 1
    %s2265 = scalar_lea.sflag [#allocation7], 1
    %2266 = vsyncpa %s2265, 1

</llo_original>
